<compile_context>
chip_gen: v7x
topology: tpu7x:2x2x1
jax: 0.10.0
libtpu: 0.0.40
codegen_flags: <defaults>
</compile_context>

<pallas_src>
import functools
import math

import jax
import jax.numpy as jnp
from jax import lax
from jax.experimental import pallas as pl
from jax.experimental.pallas import tpu as pltpu


def _round_up(x, m):
    return ((x + m - 1) // m) * m


# ----------------------------------------------------------------------------
# Kernel
# ----------------------------------------------------------------------------
def gnn_kernel(a_in_ref, a_out_ref, h_ref, w_ref, b_ref, out_ref, *,
               step, hp, mxu_dtype):
    f32 = jnp.float32

    # Per-program block-diagonal adjacency halves (M, M).
    a_in = a_in_ref[...].astype(mxu_dtype)
    a_out = a_out_ref[...].astype(mxu_dtype)

    # Packed weights: [W_ih_in, W_ih_out, W_hh, W_edge(|pad)], each (Hp, 3Hp).
    w_ih_in = w_ref[0].astype(mxu_dtype)
    w_ih_out = w_ref[1].astype(mxu_dtype)
    w_hh = w_ref[2].astype(mxu_dtype)
    w_edge = w_ref[3][:, :2 * hp].astype(mxu_dtype)          # (Hp, 2Hp)

    # Packed biases (kept (1, X); broadcast-add, no (M, X) materialization).
    b_all = b_ref[...]                                        # (3, 3Hp) f32
    b_gi = b_all[0:1, :]                                      # b_ih + folded b_iah/b_oah
    b_gh = b_all[1:2, :]
    b_edge = b_all[2:3, :2 * hp]                              # (1, 2Hp)

    def cell(_, hidden):                                      # hidden: (M, Hp) f32
        h_m = hidden.astype(mxu_dtype)

        # Fused linear_edge_in / linear_edge_out -> (M, 2Hp).
        h_io = jnp.dot(h_m, w_edge, preferred_element_type=f32) + b_edge
        h_io_m = h_io.astype(mxu_dtype)

        # Block-diagonal adjacency aggregation: one dense MXU pass per half.
        in_in = jnp.dot(a_in, h_io_m[:, :hp], preferred_element_type=f32)
        in_out = jnp.dot(a_out, h_io_m[:, hp:], preferred_element_type=f32)

        # Fused 3Hp-wide GRU gate matmuls (b_iah/b_oah already folded into b_gi).
        gi = (jnp.dot(in_in.astype(mxu_dtype), w_ih_in, preferred_element_type=f32)
              + jnp.dot(in_out.astype(mxu_dtype), w_ih_out, preferred_element_type=f32)
              + b_gi)                                         # (M, 3Hp)
        gh = jnp.dot(h_m, w_hh, preferred_element_type=f32) + b_gh

        # Gate splits land exactly on 128-lane boundaries (hp % 128 == 0).
        resetgate = jax.nn.sigmoid(gi[:, :hp] + gh[:, :hp])
        inputgate = jax.nn.sigmoid(gi[:, hp:2 * hp] + gh[:, hp:2 * hp])
        newgate = jnp.tanh(gi[:, 2 * hp:] + resetgate * gh[:, 2 * hp:])
        return newgate + inputgate * (hidden - newgate)

    hidden0 = h_ref[...].astype(f32)
    # `step` is a small static int: fully unroll for LLO scheduler visibility.
    hy = lax.fori_loop(0, step, cell, hidden0, unroll=True)
    out_ref[...] = hy.astype(out_ref.dtype)


# ----------------------------------------------------------------------------
# Block sizing (VMEM-budgeted, per-generation best effort)
# ----------------------------------------------------------------------------
def _device_kind():
    try:
        return jax.devices()[0].device_kind.lower()
    except Exception:
        return ""


def _default_target_m():
    kind = _device_kind()
    if "v5 lite" in kind or "v5e" in kind or "v5lite" in kind:
        return 128            # v5e: 128-wide MXU, 1 vst slot -> smaller slab
    return 256                # v6e / v7x: 256-wide MXU


def _prefer_two_programs():
    # v7x has 2 TensorCores/chip; keep >= 2 grid programs so the "parallel"
    # grid axis can be sharded across them.  Best-effort string check.
    return "7" in _device_kind()


def _vmem_footprint_bytes(tb, n_p, h_p, mxu_bytes):
    m = tb * n_p
    adj = 2 * m * m * mxu_bytes                  # a_in + a_out, one buffer
    hid = m * h_p * 4
    inputs = 2 * (adj + hid)                     # double-buffered input DMAs
    out = 2 * m * h_p * 4                        # double-buffered output
    temps = 16 * m * h_p * 4                     # live f32 gate temporaries
    weights = 2 * (4 * h_p * 3 * h_p + 3 * 3 * h_p) * 4
    return inputs + out + temps + weights


def _pick_block_batch(batch, n_p, h_p, *, mxu_bytes, target_m, budget_bytes,
                      two_programs):
    tb_cap = max(1, target_m // n_p)
    if two_programs and batch >= 2:
        tb_cap = min(tb_cap, -(-batch // 2))     # keep grid >= 2 (v7x)
    tb_cap = min(tb_cap, batch)
    tb = 1
    for cand in range(1, tb_cap + 1):
        if _vmem_footprint_bytes(cand, n_p, h_p, mxu_bytes) <= budget_bytes:
            tb = cand
    return tb


# ----------------------------------------------------------------------------
# Wrapper
# ----------------------------------------------------------------------------
def gnn_forward(A, hidden, params, *, step, mxu_dtype=jnp.float32,
                target_m=None, vmem_budget_bytes=12 * 1024 * 1024,
                block_b=None):
    """A: (B, N, 2N) f32, hidden: (B, N, H) f32 -> (B, N, H).

    mxu_dtype: dtype fed to the MXU matmuls.  f32 (default) for exact parity
    with the reference; bf16 is the fast path (gate math stays f32).
    """
    B, N, H = hidden.shape
    assert A.shape == (B, N, 2 * N), (A.shape, (B, N, 2 * N))

    f32 = jnp.float32
    mxu_bytes = jnp.dtype(mxu_dtype).itemsize
    n_align = max(8, 32 // mxu_bytes)            # 8 for f32, 16 for bf16
    n_p = _round_up(N, n_align)
    h_p = _round_up(H, 128)                      # lane-dense compute & stores
    if target_m is None:
        target_m = _default_target_m()

    tb = (block_b if block_b is not None else
          _pick_block_batch(B, n_p, h_p, mxu_bytes=mxu_bytes,
                            target_m=target_m,
                            budget_bytes=vmem_budget_bytes,
                            two_programs=_prefer_two_programs()))
    grid_b = -(-B // tb)
    b_p = grid_b * tb
    m = tb * n_p

    # -- adjacency: split halves, zero-pad, build per-program block-diagonal
    # (m, m) slabs so the aggregation is one dense MXU matmul per half.
    a_in = jnp.pad(A[:, :, :N].astype(f32),
                   ((0, b_p - B), (0, n_p - N), (0, n_p - N)))
    a_out = jnp.pad(A[:, :, N:2 * N].astype(f32),
                    ((0, b_p - B), (0, n_p - N), (0, n_p - N)))
    eye = jnp.eye(tb, dtype=f32)

    def block_diag(a):                           # (b_p, n_p, n_p) -> (grid_b*m, m)
        a_g = a.reshape(grid_b, tb, n_p, n_p)
        bd = jnp.einsum('gtij,ts->gtisj', a_g, eye)
        return bd.reshape(grid_b * m, m).astype(mxu_dtype)

    a_in_bd = block_diag(a_in)
    a_out_bd = block_diag(a_out)

    # -- hidden: zero-pad to (b_p, n_p, h_p), flatten to a lane-dense slab.
    h0 = jnp.pad(hidden.astype(f32),
                 ((0, b_p - B), (0, n_p - N), (0, h_p - H)))
    h0 = h0.reshape(grid_b * m, h_p)

    # -- weights: transpose to x @ W form, pad each gate block to h_p, pack
    # the four (h_p, 3*h_p) slabs into ONE ref.
    wt_ih = params["w_ih"].T.astype(f32)         # (2H, 3H)
    wt_hh = params["w_hh"].T.astype(f32)         # (H, 3H)
    wt_in = params["w_edge_in"].T.astype(f32)    # (H, H)
    wt_out = params["w_edge_out"].T.astype(f32)  # (H, H)

    def pad_blocks(w, n_blocks):                 # (H, n*H) -> (h_p, n*h_p)
        out = jnp.zeros((h_p, n_blocks * h_p), f32)
        for g in range(n_blocks):
            out = out.at[:H, g * h_p:g * h_p + H].set(w[:, g * H:(g + 1) * H])
        return out

    w_ih_in_p = pad_blocks(wt_ih[:H], 3)
    w_ih_out_p = pad_blocks(wt_ih[H:], 3)
    w_hh_p = pad_blocks(wt_hh, 3)
    w_edge_p = jnp.pad(pad_blocks(jnp.concatenate([wt_in, wt_out], axis=1), 2),
                       ((0, 0), (0, h_p)))
    w_all = jnp.stack([w_ih_in_p, w_ih_out_p, w_hh_p, w_edge_p])  # (4,h_p,3h_p)

    # -- biases: fold b_iah/b_oah into the gate-input bias (exact in f32),
    # pack everything into one (3, 3*h_p) ref of (1, X)-style rows.
    b_ih = params["b_ih"].astype(f32)
    b_hh = params["b_hh"].astype(f32)
    b_iah = params["b_iah"].astype(f32)
    b_oah = params["b_oah"].astype(f32)
    b_gi = b_ih + b_iah @ wt_ih[:H] + b_oah @ wt_ih[H:]

    def pad_bias(b, n_blocks):                   # (n*H,) -> (n*h_p,)
        out = jnp.zeros((n_blocks * h_p,), f32)
        for g in range(n_blocks):
            out = out.at[g * h_p:g * h_p + H].set(b[g * H:(g + 1) * H])
        return out

    b_edge = jnp.pad(
        pad_bias(jnp.concatenate([params["b_edge_in"].astype(f32),
                                  params["b_edge_out"].astype(f32)]), 2),
        (0, h_p))
    b_all = jnp.stack([pad_bias(b_gi, 3), pad_bias(b_hh, 3), b_edge])  # (3,3h_p)

    kernel = functools.partial(gnn_kernel, step=step, hp=h_p,
                               mxu_dtype=mxu_dtype)

    footprint = _vmem_footprint_bytes(tb, n_p, h_p, mxu_bytes)
    # Explicit scoped-VMEM limit: above the v5e 16 MiB default, safely under
    # v7x's 64 MiB physical.
    vmem_limit = int(min(48 * 2 ** 20, max(32 * 2 ** 20, 2 * footprint)))

    out_flat = pl.pallas_call(
        kernel,
        out_shape=jax.ShapeDtypeStruct((grid_b * m, h_p), hidden.dtype),
        grid_spec=pltpu.PrefetchScalarGridSpec(
            num_scalar_prefetch=0,
            grid=(grid_b,),
            in_specs=[
                pl.BlockSpec((m, m), lambda b: (b, 0)),        # a_in (block-diag)
                pl.BlockSpec((m, m), lambda b: (b, 0)),        # a_out (block-diag)
                pl.BlockSpec((m, h_p), lambda b: (b, 0)),      # hidden slab
                pl.BlockSpec(w_all.shape, lambda b: (0, 0, 0)),  # packed weights
                pl.BlockSpec(b_all.shape, lambda b: (0, 0)),     # packed biases
            ],
            out_specs=pl.BlockSpec((m, h_p), lambda b: (b, 0)),
        ),
        compiler_params=pltpu.CompilerParams(
            dimension_semantics=("parallel",),
            vmem_limit_bytes=vmem_limit),
    )(a_in_bd, a_out_bd, h0, w_all, b_all)

    return out_flat.reshape(b_p, n_p, h_p)[:B, :N, :H]


# ----------------------------------------------------------------------------
# Pure-JAX reference (mirrors the PyTorch module)
# ----------------------------------------------------------------------------
def gnn_reference(A, hidden, params, *, step):
    B, N, H = hidden.shape
    for _ in range(step):
        h_in = hidden @ params["w_edge_in"].T + params["b_edge_in"]
        h_out = hidden @ params["w_edge_out"].T + params["b_edge_out"]
        input_in = jnp.matmul(A[:, :, :N], h_in) + params["b_iah"]
        input_out = jnp.matmul(A[:, :, N:2 * N], h_out) + params["b_oah"]
        inputs = jnp.concatenate([input_in, input_out], axis=2)
        gi = inputs @ params["w_ih"].T + params["b_ih"]
        gh = hidden @ params["w_hh"].T + params["b_hh"]
        i_r, i_i, i_n = jnp.split(gi, 3, axis=2)
        h_r, h_i, h_n = jnp.split(gh, 3, axis=2)
        resetgate = jax.nn.sigmoid(i_r + h_r)
        inputgate = jax.nn.sigmoid(i_i + h_i)
        newgate = jnp.tanh(i_n + resetgate * h_n)
        hidden = newgate + inputgate * (hidden - newgate)
    return hidden


if __name__ == "__main__":
    def make_params(h, key):
        keys = jax.random.split(key, 10)
        stdv = 1.0 / math.sqrt(h)

        def u(k, shape):
            return jax.random.uniform(k, shape, jnp.float32, -stdv, stdv)

        return {
            "w_ih": u(keys[0], (3 * h, 2 * h)),
            "w_hh": u(keys[1], (3 * h, h)),
            "b_ih": u(keys[2], (3 * h,)),
            "b_hh": u(keys[3], (3 * h,)),
            "b_iah": u(keys[4], (h,)),
            "b_oah": u(keys[5], (h,)),
            "w_edge_in": u(keys[6], (h, h)),
            "b_edge_in": u(keys[7], (h,)),
            "w_edge_out": u(keys[8], (h, h)),
            "b_edge_out": u(keys[9], (h,)),
            # TODO(synk): linear_edge_f exists in the PyTorch __init__ but is
            # never used in forward(), so it is intentionally omitted.
        }

    # -- main check: B=2, N=8, H=32, step=2 (f32 MXU feed, exact path) ------
    B, N, H, STEP = 2, 8, 32, 2
    kp, ka, kh = jax.random.split(jax.random.PRNGKey(0), 3)
    params = make_params(H, kp)
    A = jax.random.uniform(ka, (B, N, 2 * N), jnp.float32, 0.0, 1.0)
    hidden = jax.random.normal(kh, (B, N, H), jnp.float32)

    ref = gnn_reference(A, hidden, params, step=STEP)
    out = jax.block_until_ready(gnn_forward(A, hidden, params, step=STEP))
    assert out.shape == (B, N, H)
    assert jnp.allclose(out, ref, atol=1e-3, rtol=1e-3), "f32 kernel mismatch"

    # -- ragged shapes: exercise the N / B zero-padding path -----------------
    B2, N2, H2, STEP2 = 3, 10, 32, 3
    kp2, ka2, kh2 = jax.random.split(jax.random.PRNGKey(1), 3)
    params2 = make_params(H2, kp2)
    A2 = jax.random.uniform(ka2, (B2, N2, 2 * N2), jnp.float32, 0.0, 1.0)
    hidden2 = jax.random.normal(kh2, (B2, N2, H2), jnp.float32)
    ref2 = gnn_reference(A2, hidden2, params2, step=STEP2)
    out2 = jax.block_until_ready(gnn_forward(A2, hidden2, params2, step=STEP2))
    assert out2.shape == (B2, N2, H2)
    assert jnp.allclose(out2, ref2, atol=1e-3, rtol=1e-3), "padded kernel mismatch"

    # -- bf16 MXU-feed fast path (gate math stays f32; loose tolerance) ------
    out_bf16 = jax.block_until_ready(
        gnn_forward(A, hidden, params, step=STEP, mxu_dtype=jnp.bfloat16))
    assert out_bf16.shape == (B, N, H)
    assert bool(jnp.isfinite(out_bf16).all())
    assert jnp.allclose(out_bf16, ref, atol=1e-1, rtol=1e-1), "bf16 kernel drift"

    print("KERNEL_OK")
</pallas_src>

<mosaic_0001>
module attributes {stable_mosaic.version = 11 : i64} {
  func.func @gnn_kernel(%arg0: i32, %arg1: memref<16x16xf32, #tpu.memory_space<vmem>>, %arg2: memref<16x16xf32, #tpu.memory_space<vmem>>, %arg3: memref<16x128xf32, #tpu.memory_space<vmem>>, %arg4: memref<4x128x384xf32, #tpu.memory_space<vmem>>, %arg5: memref<3x384xf32, #tpu.memory_space<vmem>>, %arg6: memref<16x128xf32, #tpu.memory_space<vmem>>) attributes {dimension_semantics = [#tpu.dimension_semantics<parallel>], iteration_bounds = array<i64: 1>, scalar_prefetch = 0 : i64, scratch_operands = 0 : i64, tpu.core_type = #tpu.core_type<tc>, window_params = [{transform_indices = @transform_0, window_bounds = array<i64: 16, 16>}, {transform_indices = @transform_1, window_bounds = array<i64: 16, 16>}, {transform_indices = @transform_2, window_bounds = array<i64: 16, 128>}, {pipeline_mode = #tpu.pipeline_mode<synchronous>, transform_indices = @transform_3, window_bounds = array<i64: 4, 128, 384>}, {pipeline_mode = #tpu.pipeline_mode<synchronous>, transform_indices = @transform_4, window_bounds = array<i64: 3, 384>}, {transform_indices = @transform_5, window_bounds = array<i64: 16, 128>}]} {
    %c0 = arith.constant 0 : index
    %c0_0 = arith.constant 0 : index
    %0 = vector.load %arg1[%c0, %c0_0] : memref<16x16xf32, #tpu.memory_space<vmem>>, vector<16x16xf32>
    %c0_1 = arith.constant 0 : index
    %c0_2 = arith.constant 0 : index
    %1 = vector.load %arg2[%c0_1, %c0_2] : memref<16x16xf32, #tpu.memory_space<vmem>>, vector<16x16xf32>
    %c0_3 = arith.constant 0 : index
    %c0_4 = arith.constant 0 : index
    %c0_5 = arith.constant 0 : index
    %2 = vector.load %arg4[%c0_3, %c0_4, %c0_5] : memref<4x128x384xf32, #tpu.memory_space<vmem>>, vector<1x128x384xf32>
    %3 = vector.shape_cast %2 : vector<1x128x384xf32> to vector<128x384xf32>
    %c1 = arith.constant 1 : index
    %c0_6 = arith.constant 0 : index
    %c0_7 = arith.constant 0 : index
    %4 = vector.load %arg4[%c1, %c0_6, %c0_7] : memref<4x128x384xf32, #tpu.memory_space<vmem>>, vector<1x128x384xf32>
    %5 = vector.shape_cast %4 : vector<1x128x384xf32> to vector<128x384xf32>
    %c2 = arith.constant 2 : index
    %c0_8 = arith.constant 0 : index
    %c0_9 = arith.constant 0 : index
    %6 = vector.load %arg4[%c2, %c0_8, %c0_9] : memref<4x128x384xf32, #tpu.memory_space<vmem>>, vector<1x128x384xf32>
    %7 = vector.shape_cast %6 : vector<1x128x384xf32> to vector<128x384xf32>
    %c3 = arith.constant 3 : index
    %c0_10 = arith.constant 0 : index
    %c0_11 = arith.constant 0 : index
    %8 = vector.load %arg4[%c3, %c0_10, %c0_11] : memref<4x128x384xf32, #tpu.memory_space<vmem>>, vector<1x128x384xf32>
    %9 = vector.shape_cast %8 : vector<1x128x384xf32> to vector<128x384xf32>
    %10 = vector.extract_strided_slice %9 {offsets = [0, 0], sizes = [128, 256], strides = [1, 1]} : vector<128x384xf32> to vector<128x256xf32>
    %c0_12 = arith.constant 0 : index
    %c0_13 = arith.constant 0 : index
    %11 = vector.load %arg5[%c0_12, %c0_13] : memref<3x384xf32, #tpu.memory_space<vmem>>, vector<3x384xf32>
    %12 = vector.extract_strided_slice %11 {offsets = [0, 0], sizes = [1, 384], strides = [1, 1]} : vector<3x384xf32> to vector<1x384xf32>
    %13 = vector.extract_strided_slice %11 {offsets = [1, 0], sizes = [1, 384], strides = [1, 1]} : vector<3x384xf32> to vector<1x384xf32>
    %14 = vector.extract_strided_slice %11 {offsets = [2, 0], sizes = [1, 256], strides = [1, 1]} : vector<3x384xf32> to vector<1x256xf32>
    %c0_14 = arith.constant 0 : index
    %c0_15 = arith.constant 0 : index
    %15 = vector.load %arg3[%c0_14, %c0_15] : memref<16x128xf32, #tpu.memory_space<vmem>>, vector<16x128xf32>
    %c0_i32 = arith.constant 0 : i32
    %cst = arith.constant dense<0.000000e+00> : vector<16x256xf32>
    %16 = tpu.matmul %15, %10, %cst {dimension_numbers = #tpu.dot_dimension_numbers<[1], [0], [0], [1], [0, 0, 1, 1], [], []>} : vector<16x128xf32>, vector<128x256xf32>, vector<16x256xf32> -> vector<16x256xf32>
    %17 = vector.broadcast %14 : vector<1x256xf32> to vector<16x256xf32>
    %18 = arith.addf %16, %17 : vector<16x256xf32>
    %19 = vector.extract_strided_slice %18 {offsets = [0, 0], sizes = [16, 128], strides = [1, 1]} : vector<16x256xf32> to vector<16x128xf32>
    %cst_16 = arith.constant dense<0.000000e+00> : vector<16x128xf32>
    %20 = tpu.matmul %0, %19, %cst_16 {dimension_numbers = #tpu.dot_dimension_numbers<[1], [0], [0], [1], [0, 0, 1, 1], [], []>} : vector<16x16xf32>, vector<16x128xf32>, vector<16x128xf32> -> vector<16x128xf32>
    %21 = vector.extract_strided_slice %18 {offsets = [0, 128], sizes = [16, 128], strides = [1, 1]} : vector<16x256xf32> to vector<16x128xf32>
    %cst_17 = arith.constant dense<0.000000e+00> : vector<16x128xf32>
    %22 = tpu.matmul %1, %21, %cst_17 {dimension_numbers = #tpu.dot_dimension_numbers<[1], [0], [0], [1], [0, 0, 1, 1], [], []>} : vector<16x16xf32>, vector<16x128xf32>, vector<16x128xf32> -> vector<16x128xf32>
    %cst_18 = arith.constant dense<0.000000e+00> : vector<16x384xf32>
    %23 = tpu.matmul %20, %3, %cst_18 {dimension_numbers = #tpu.dot_dimension_numbers<[1], [0], [0], [1], [0, 0, 1, 1], [], []>} : vector<16x128xf32>, vector<128x384xf32>, vector<16x384xf32> -> vector<16x384xf32>
    %cst_19 = arith.constant dense<0.000000e+00> : vector<16x384xf32>
    %24 = tpu.matmul %22, %5, %cst_19 {dimension_numbers = #tpu.dot_dimension_numbers<[1], [0], [0], [1], [0, 0, 1, 1], [], []>} : vector<16x128xf32>, vector<128x384xf32>, vector<16x384xf32> -> vector<16x384xf32>
    %25 = arith.addf %23, %24 : vector<16x384xf32>
    %26 = vector.broadcast %12 : vector<1x384xf32> to vector<16x384xf32>
    %27 = arith.addf %25, %26 : vector<16x384xf32>
    %cst_20 = arith.constant dense<0.000000e+00> : vector<16x384xf32>
    %28 = tpu.matmul %15, %7, %cst_20 {dimension_numbers = #tpu.dot_dimension_numbers<[1], [0], [0], [1], [0, 0, 1, 1], [], []>} : vector<16x128xf32>, vector<128x384xf32>, vector<16x384xf32> -> vector<16x384xf32>
    %29 = vector.broadcast %13 : vector<1x384xf32> to vector<16x384xf32>
    %30 = arith.addf %28, %29 : vector<16x384xf32>
    %31 = vector.extract_strided_slice %27 {offsets = [0, 0], sizes = [16, 128], strides = [1, 1]} : vector<16x384xf32> to vector<16x128xf32>
    %32 = vector.extract_strided_slice %30 {offsets = [0, 0], sizes = [16, 128], strides = [1, 1]} : vector<16x384xf32> to vector<16x128xf32>
    %33 = arith.addf %31, %32 : vector<16x128xf32>
    %34 = arith.negf %33 : vector<16x128xf32>
    %35 = math.exp %34 : vector<16x128xf32>
    %cst_21 = arith.constant 1.000000e+00 : f32
    %36 = vector.broadcast %cst_21 : f32 to vector<16x128xf32>
    %37 = arith.addf %36, %35 : vector<16x128xf32>
    %38 = arith.divf %36, %37 : vector<16x128xf32>
    %39 = vector.extract_strided_slice %27 {offsets = [0, 128], sizes = [16, 128], strides = [1, 1]} : vector<16x384xf32> to vector<16x128xf32>
    %40 = vector.extract_strided_slice %30 {offsets = [0, 128], sizes = [16, 128], strides = [1, 1]} : vector<16x384xf32> to vector<16x128xf32>
    %41 = arith.addf %39, %40 : vector<16x128xf32>
    %42 = arith.negf %41 : vector<16x128xf32>
    %43 = math.exp %42 : vector<16x128xf32>
    %cst_22 = arith.constant 1.000000e+00 : f32
    %44 = vector.broadcast %cst_22 : f32 to vector<16x128xf32>
    %45 = arith.addf %44, %43 : vector<16x128xf32>
    %46 = arith.divf %44, %45 : vector<16x128xf32>
    %47 = vector.extract_strided_slice %27 {offsets = [0, 256], sizes = [16, 128], strides = [1, 1]} : vector<16x384xf32> to vector<16x128xf32>
    %48 = vector.extract_strided_slice %30 {offsets = [0, 256], sizes = [16, 128], strides = [1, 1]} : vector<16x384xf32> to vector<16x128xf32>
    %49 = arith.mulf %38, %48 : vector<16x128xf32>
    %50 = arith.addf %47, %49 : vector<16x128xf32>
    %51 = math.tanh %50 : vector<16x128xf32>
    %52 = arith.subf %15, %51 : vector<16x128xf32>
    %53 = arith.mulf %46, %52 : vector<16x128xf32>
    %54 = arith.addf %51, %53 : vector<16x128xf32>
    %c1_i32 = arith.constant 1 : i32
    %cst_23 = arith.constant dense<0.000000e+00> : vector<16x256xf32>
    %55 = tpu.matmul %54, %10, %cst_23 {dimension_numbers = #tpu.dot_dimension_numbers<[1], [0], [0], [1], [0, 0, 1, 1], [], []>} : vector<16x128xf32>, vector<128x256xf32>, vector<16x256xf32> -> vector<16x256xf32>
    %56 = vector.broadcast %14 : vector<1x256xf32> to vector<16x256xf32>
    %57 = arith.addf %55, %56 : vector<16x256xf32>
    %58 = vector.extract_strided_slice %57 {offsets = [0, 0], sizes = [16, 128], strides = [1, 1]} : vector<16x256xf32> to vector<16x128xf32>
    %cst_24 = arith.constant dense<0.000000e+00> : vector<16x128xf32>
    %59 = tpu.matmul %0, %58, %cst_24 {dimension_numbers = #tpu.dot_dimension_numbers<[1], [0], [0], [1], [0, 0, 1, 1], [], []>} : vector<16x16xf32>, vector<16x128xf32>, vector<16x128xf32> -> vector<16x128xf32>
    %60 = vector.extract_strided_slice %57 {offsets = [0, 128], sizes = [16, 128], strides = [1, 1]} : vector<16x256xf32> to vector<16x128xf32>
    %cst_25 = arith.constant dense<0.000000e+00> : vector<16x128xf32>
    %61 = tpu.matmul %1, %60, %cst_25 {dimension_numbers = #tpu.dot_dimension_numbers<[1], [0], [0], [1], [0, 0, 1, 1], [], []>} : vector<16x16xf32>, vector<16x128xf32>, vector<16x128xf32> -> vector<16x128xf32>
    %cst_26 = arith.constant dense<0.000000e+00> : vector<16x384xf32>
    %62 = tpu.matmul %59, %3, %cst_26 {dimension_numbers = #tpu.dot_dimension_numbers<[1], [0], [0], [1], [0, 0, 1, 1], [], []>} : vector<16x128xf32>, vector<128x384xf32>, vector<16x384xf32> -> vector<16x384xf32>
    %cst_27 = arith.constant dense<0.000000e+00> : vector<16x384xf32>
    %63 = tpu.matmul %61, %5, %cst_27 {dimension_numbers = #tpu.dot_dimension_numbers<[1], [0], [0], [1], [0, 0, 1, 1], [], []>} : vector<16x128xf32>, vector<128x384xf32>, vector<16x384xf32> -> vector<16x384xf32>
    %64 = arith.addf %62, %63 : vector<16x384xf32>
    %65 = vector.broadcast %12 : vector<1x384xf32> to vector<16x384xf32>
    %66 = arith.addf %64, %65 : vector<16x384xf32>
    %cst_28 = arith.constant dense<0.000000e+00> : vector<16x384xf32>
    %67 = tpu.matmul %54, %7, %cst_28 {dimension_numbers = #tpu.dot_dimension_numbers<[1], [0], [0], [1], [0, 0, 1, 1], [], []>} : vector<16x128xf32>, vector<128x384xf32>, vector<16x384xf32> -> vector<16x384xf32>
    %68 = vector.broadcast %13 : vector<1x384xf32> to vector<16x384xf32>
    %69 = arith.addf %67, %68 : vector<16x384xf32>
    %70 = vector.extract_strided_slice %66 {offsets = [0, 0], sizes = [16, 128], strides = [1, 1]} : vector<16x384xf32> to vector<16x128xf32>
    %71 = vector.extract_strided_slice %69 {offsets = [0, 0], sizes = [16, 128], strides = [1, 1]} : vector<16x384xf32> to vector<16x128xf32>
    %72 = arith.addf %70, %71 : vector<16x128xf32>
    %73 = arith.negf %72 : vector<16x128xf32>
    %74 = math.exp %73 : vector<16x128xf32>
    %cst_29 = arith.constant 1.000000e+00 : f32
    %75 = vector.broadcast %cst_29 : f32 to vector<16x128xf32>
    %76 = arith.addf %75, %74 : vector<16x128xf32>
    %77 = arith.divf %75, %76 : vector<16x128xf32>
    %78 = vector.extract_strided_slice %66 {offsets = [0, 128], sizes = [16, 128], strides = [1, 1]} : vector<16x384xf32> to vector<16x128xf32>
    %79 = vector.extract_strided_slice %69 {offsets = [0, 128], sizes = [16, 128], strides = [1, 1]} : vector<16x384xf32> to vector<16x128xf32>
    %80 = arith.addf %78, %79 : vector<16x128xf32>
    %81 = arith.negf %80 : vector<16x128xf32>
    %82 = math.exp %81 : vector<16x128xf32>
    %cst_30 = arith.constant 1.000000e+00 : f32
    %83 = vector.broadcast %cst_30 : f32 to vector<16x128xf32>
    %84 = arith.addf %83, %82 : vector<16x128xf32>
    %85 = arith.divf %83, %84 : vector<16x128xf32>
    %86 = vector.extract_strided_slice %66 {offsets = [0, 256], sizes = [16, 128], strides = [1, 1]} : vector<16x384xf32> to vector<16x128xf32>
    %87 = vector.extract_strided_slice %69 {offsets = [0, 256], sizes = [16, 128], strides = [1, 1]} : vector<16x384xf32> to vector<16x128xf32>
    %88 = arith.mulf %77, %87 : vector<16x128xf32>
    %89 = arith.addf %86, %88 : vector<16x128xf32>
    %90 = math.tanh %89 : vector<16x128xf32>
    %91 = arith.subf %54, %90 : vector<16x128xf32>
    %92 = arith.mulf %85, %91 : vector<16x128xf32>
    %93 = arith.addf %90, %92 : vector<16x128xf32>
    %c0_31 = arith.constant 0 : index
    %c0_32 = arith.constant 0 : index
    %94 = vector.load %arg6[%c0_31, %c0_32] : memref<16x128xf32, #tpu.memory_space<vmem>>, vector<16x128xf32>
    tpu.vector_store %arg6[%c0_31, %c0_32], %93 {strides = array<i32>} : memref<16x128xf32, #tpu.memory_space<vmem>>, vector<16x128xf32>,
    return
  }
  func.func @transform_0(%arg0: i32) -> (i32, i32) {
    %c0_i32 = arith.constant 0 : i32
    %c0_i32_0 = arith.constant 0 : i32
    return %arg0, %c0_i32 : i32, i32
  }
  func.func @transform_1(%arg0: i32) -> (i32, i32) {
    %c0_i32 = arith.constant 0 : i32
    %c0_i32_0 = arith.constant 0 : i32
    return %arg0, %c0_i32 : i32, i32
  }
  func.func @transform_2(%arg0: i32) -> (i32, i32) {
    %c0_i32 = arith.constant 0 : i32
    %c0_i32_0 = arith.constant 0 : i32
    return %arg0, %c0_i32 : i32, i32
  }
  func.func @transform_3(%arg0: i32) -> (i32, i32, i32) {
    %c0_i32 = arith.constant 0 : i32
    %c0_i32_0 = arith.constant 0 : i32
    %c0_i32_1 = arith.constant 0 : i32
    %c0_i32_2 = arith.constant 0 : i32
    return %c0_i32, %c0_i32_0, %c0_i32_1 : i32, i32, i32
  }
  func.func @transform_4(%arg0: i32) -> (i32, i32) {
    %c0_i32 = arith.constant 0 : i32
    %c0_i32_0 = arith.constant 0 : i32
    %c0_i32_1 = arith.constant 0 : i32
    return %c0_i32, %c0_i32_0 : i32, i32
  }
  func.func @transform_5(%arg0: i32) -> (i32, i32) {
    %c0_i32 = arith.constant 0 : i32
    %c0_i32_0 = arith.constant 0 : i32
    return %arg0, %c0_i32 : i32, i32
  }
}

</mosaic_0001>

<llo_original>
// kernel: tpu_custom_call.1
$region0: #{tpu_custom_call.1}
  #allocation0 [shape = 'u32[]', space=smem, size = 0x4, offset = 0x4, fixed_abs, tag = 'smem constant byte address 0x4 - core index']
  #allocation1 [shape = 'u32[144,128]{1,0:T(1,128)}', space=vmem, size = 0x12000, scoped, tag = 'internal scratch']
  %s0 = inlined_call_operand.hbm [shape: f32[16,16], index: 0, kind: input, shape index: {}]
  %s1 = inlined_call_operand.hbm [shape: f32[16,16], index: 1, kind: input, shape index: {}]
  %s2 = inlined_call_operand.hbm [shape: f32[16,128], index: 2, kind: input, shape index: {}]
  %s3 = inlined_call_operand.hbm [shape: f32[4,128,384], index: 3, kind: input, shape index: {}]
  %s4 = inlined_call_operand.vmem [shape: f32[3,384], index: 4, kind: input, shape index: {}]
  %s5 = inlined_call_operand.hbm [shape: f32[16,128], index: 5, kind: output, shape index: {}]
  %s6 = sld [smem:[#allocation0]]
  $region46: #{tpu_custom_call.1} parent=0
    _
  %s8 = ssub.s32 1, %s6
  %s9 = scalar_select 0, %s8, %s6
  $region1: #{tpu_custom_call.1} parent=0
    #allocation2 [shape = 'u8[8192]{0}', space=vmem, size = 0x2000, scoped, tag = 'input window, operand 0, single buffered']
    #allocation3 [shape = 's32[1]{0}', space=sflag, size = 0x4, scoped, tag = 'scoped memory for tpu_custom_call.1']
    #allocation4 [shape = 's32[1]{0}', space=sflag, size = 0x4, scoped, tag = 'scoped memory for tpu_custom_call.1']
    #allocation5 [shape = 'u8[8192]{0}', space=vmem, size = 0x2000, scoped, tag = 'input window, operand 1, single buffered']
    #allocation6 [shape = 's32[1]{0}', space=sflag, size = 0x4, scoped, tag = 'scoped memory for tpu_custom_call.1']
    #allocation7 [shape = 'u8[8192]{0}', space=vmem, size = 0x2000, scoped, tag = 'input window, operand 2, single buffered']
    #allocation8 [shape = 'u8[786432]{0}', space=vmem, size = 0xc0000, scoped, tag = 'input window, operand 3, single buffered']
    #allocation9 [shape = 's32[1]{0}', space=sflag, size = 0x4, scoped, tag = 'scoped memory for tpu_custom_call.1']
    #allocation10 [shape = 'u8[8192]{0}', space=vmem, size = 0x2000, scoped, tag = 'output window, operand 0, single buffered']
    %10 = vsyncpa [#allocation3], 0
    %11 = vsyncpa [#allocation6], 0
    %12 = vsyncpa [#allocation9], 0
    %13 = vsyncpa [#allocation4], 0
    // Predicated region
    $region2: #{tpu_custom_call.1} parent=1 // pred_check
      _
    $region3: #{tpu_custom_call.1} parent=1 // pred_check_branch
      %15 = sbr.rel (0) target = $region5
    $region4: #{tpu_custom_call.1} parent=1 // pred_region
      %s17 = ssub.s32 256, 256
      %18 = vsyncadd [#allocation3], %s17
      %s19 = sshll.u32 [#allocation2], 4
      %s20 = int_to_ptr.vmem [resolvable:$true] %s19
      %25 = dma.hbm_to_vmem [thread:$0]  %s0, 256, %s20, [#allocation3], 128, 128, 8
    $region5: #{tpu_custom_call.1} parent=1 // pred_fallthru
      _
    // Predicated region
    $region6: #{tpu_custom_call.1} parent=1 // pred_check
      _
    $region7: #{tpu_custom_call.1} parent=1 // pred_check_branch
      %27 = sbr.rel (0) target = $region9
    $region8: #{tpu_custom_call.1} parent=1 // pred_region
      %s29 = ssub.s32 256, 256
      %30 = vsyncadd [#allocation6], %s29
      %s31 = sshll.u32 [#allocation5], 4
      %s32 = int_to_ptr.vmem [resolvable:$true] %s31
      %37 = dma.hbm_to_vmem [thread:$0]  %s1, 256, %s32, [#allocation6], 128, 128, 8
    $region9: #{tpu_custom_call.1} parent=1 // pred_fallthru
      _
    // Predicated region
    $region10: #{tpu_custom_call.1} parent=1 // pred_check
      _
    $region11: #{tpu_custom_call.1} parent=1 // pred_check_branch
      %39 = sbr.rel (0) target = $region13
    $region12: #{tpu_custom_call.1} parent=1 // pred_region
      %s41 = ssub.s32 256, 256
      %42 = vsyncadd [#allocation6], %s41
      %s43 = sshll.u32 [#allocation7], 4
      %s44 = int_to_ptr.vmem [resolvable:$true] %s43
      %49 = dma.hbm_to_vmem [thread:$0]  %s2, 256, %s44, [#allocation6], 128, 128, 8
    $region13: #{tpu_custom_call.1} parent=1 // pred_fallthru
      _
    // Predicated region
    $region14: #{tpu_custom_call.1} parent=1 // pred_check
      _
    $region15: #{tpu_custom_call.1} parent=1 // pred_check_branch
      %51 = sbr.rel (0) target = $region17
    $region16: #{tpu_custom_call.1} parent=1 // pred_region
      %s53 = ssub.s32 24576, 24576
      %54 = vsyncadd [#allocation9], %s53
      %s55 = sshll.u32 [#allocation8], 4
      %s56 = int_to_ptr.vmem [resolvable:$true] %s55
      %61 = dma.hbm_to_vmem [thread:$0]  %s3, 24576, %s56, [#allocation9], 384, 384, 24
    $region17: #{tpu_custom_call.1} parent=1 // pred_fallthru
      _
    // Predicated region
    $region18: #{tpu_custom_call.1} parent=1 // pred_check
      _
    $region19: #{tpu_custom_call.1} parent=1 // pred_check_branch
      %63 = sbr.rel (0) target = $region21
    $region20: #{tpu_custom_call.1} parent=1 // pred_region
      _
    $region21: #{tpu_custom_call.1} parent=1 // pred_fallthru
      _
    // Predicated region
    $region22: #{tpu_custom_call.1} parent=1 // pred_check
      _
    $region23: #{tpu_custom_call.1} parent=1 // pred_check_branch
      %65 = sbr.rel (0) target = $region25
    $region24: #{tpu_custom_call.1} parent=1 // pred_region
      %66 = dma.done [#allocation3], 256
    $region25: #{tpu_custom_call.1} parent=1 // pred_fallthru
      _
    // Predicated region
    $region26: #{tpu_custom_call.1} parent=1 // pred_check
      _
    $region27: #{tpu_custom_call.1} parent=1 // pred_check_branch
      %68 = sbr.rel (0) target = $region29
    $region28: #{tpu_custom_call.1} parent=1 // pred_region
      %69 = dma.done [#allocation6], 256
    $region29: #{tpu_custom_call.1} parent=1 // pred_fallthru
      _
    // Predicated region
    $region30: #{tpu_custom_call.1} parent=1 // pred_check
      _
    $region31: #{tpu_custom_call.1} parent=1 // pred_check_branch
      %71 = sbr.rel (0) target = $region33
    $region32: #{tpu_custom_call.1} parent=1 // pred_region
      %72 = dma.done [#allocation6], 256
    $region33: #{tpu_custom_call.1} parent=1 // pred_fallthru
      _
    // Predicated region
    $region34: #{tpu_custom_call.1} parent=1 // pred_check
      _
    $region35: #{tpu_custom_call.1} parent=1 // pred_check_branch
      %74 = sbr.rel (0) target = $region37
    $region36: #{tpu_custom_call.1} parent=1 // pred_region
      %75 = dma.done [#allocation9], 24576
    $region37: #{tpu_custom_call.1} parent=1 // pred_fallthru
      _
    %v76 = vld [vmem:[#allocation2] sm:$0xff]
    %v77 = vld [vmem:[#allocation2 + $0x8] sm:$0xff]
    %v78 = vld [vmem:[#allocation5] sm:$0xff]
    %v79 = vld [vmem:[#allocation5 + $0x8] sm:$0xff]
    %v80 = vld [vmem:[#allocation8] sm:$0xff]
    %v81 = vld [vmem:[#allocation8 + $0x8] sm:$0xff]
    %v82 = vld [vmem:[#allocation8 + $0x10] sm:$0xff]
    %v83 = vld [vmem:[#allocation8 + $0x18] sm:$0xff]
    %v84 = vld [vmem:[#allocation8 + $0x20] sm:$0xff]
    %v85 = vld [vmem:[#allocation8 + $0x28] sm:$0xff]
    %v86 = vld [vmem:[#allocation8 + $0x30] sm:$0xff]
    %v87 = vld [vmem:[#allocation8 + $0x38] sm:$0xff]
    %v88 = vld [vmem:[#allocation8 + $0x40] sm:$0xff]
    %v89 = vld [vmem:[#allocation8 + $0x48] sm:$0xff]
    %v90 = vld [vmem:[#allocation8 + $0x50] sm:$0xff]
    %v91 = vld [vmem:[#allocation8 + $0x58] sm:$0xff]
    %v92 = vld [vmem:[#allocation8 + $0x60] sm:$0xff]
    %v93 = vld [vmem:[#allocation8 + $0x68] sm:$0xff]
    %v94 = vld [vmem:[#allocation8 + $0x70] sm:$0xff]
    %v95 = vld [vmem:[#allocation8 + $0x78] sm:$0xff]
    %v96 = vld [vmem:[#allocation8 + $0x80] sm:$0xff]
    %v97 = vld [vmem:[#allocation8 + $0x88] sm:$0xff]
    %v98 = vld [vmem:[#allocation8 + $0x90] sm:$0xff]
    %v99 = vld [vmem:[#allocation8 + $0x98] sm:$0xff]
    %v100 = vld [vmem:[#allocation8 + $0xa0] sm:$0xff]
    %v101 = vld [vmem:[#allocation8 + $0xa8] sm:$0xff]
    %v102 = vld [vmem:[#allocation8 + $0xb0] sm:$0xff]
    %v103 = vld [vmem:[#allocation8 + $0xb8] sm:$0xff]
    %v104 = vld [vmem:[#allocation8 + $0xc0] sm:$0xff]
    %v105 = vld [vmem:[#allocation8 + $0xc8] sm:$0xff]
    %v106 = vld [vmem:[#allocation8 + $0xd0] sm:$0xff]
    %v107 = vld [vmem:[#allocation8 + $0xd8] sm:$0xff]
    %v108 = vld [vmem:[#allocation8 + $0xe0] sm:$0xff]
    %v109 = vld [vmem:[#allocation8 + $0xe8] sm:$0xff]
    %v110 = vld [vmem:[#allocation8 + $0xf0] sm:$0xff]
    %v111 = vld [vmem:[#allocation8 + $0xf8] sm:$0xff]
    %v112 = vld [vmem:[#allocation8 + $0x100] sm:$0xff]
    %v113 = vld [vmem:[#allocation8 + $0x108] sm:$0xff]
    %v114 = vld [vmem:[#allocation8 + $0x110] sm:$0xff]
    %v115 = vld [vmem:[#allocation8 + $0x118] sm:$0xff]
    %v116 = vld [vmem:[#allocation8 + $0x120] sm:$0xff]
    %v117 = vld [vmem:[#allocation8 + $0x128] sm:$0xff]
    %v118 = vld [vmem:[#allocation8 + $0x130] sm:$0xff]
    %v119 = vld [vmem:[#allocation8 + $0x138] sm:$0xff]
    %v120 = vld [vmem:[#allocation8 + $0x140] sm:$0xff]
    %v121 = vld [vmem:[#allocation8 + $0x148] sm:$0xff]
    %v122 = vld [vmem:[#allocation8 + $0x150] sm:$0xff]
    %v123 = vld [vmem:[#allocation8 + $0x158] sm:$0xff]
    %v124 = vld [vmem:[#allocation8 + $0x160] sm:$0xff]
    %v125 = vld [vmem:[#allocation8 + $0x168] sm:$0xff]
    %v126 = vld [vmem:[#allocation8 + $0x170] sm:$0xff]
    %v127 = vld [vmem:[#allocation8 + $0x178] sm:$0xff]
    %s128 = scalar_lea.vmem [#allocation8], 384
    %v129 = vld [vmem:[%s128] sm:$0xff]
    %v130 = vld [vmem:[%s128 + $0x8] sm:$0xff]
    %v131 = vld [vmem:[%s128 + $0x10] sm:$0xff]
    %v132 = vld [vmem:[%s128 + $0x18] sm:$0xff]
    %v133 = vld [vmem:[%s128 + $0x20] sm:$0xff]
    %v134 = vld [vmem:[%s128 + $0x28] sm:$0xff]
    %v135 = vld [vmem:[%s128 + $0x30] sm:$0xff]
    %v136 = vld [vmem:[%s128 + $0x38] sm:$0xff]
    %v137 = vld [vmem:[%s128 + $0x40] sm:$0xff]
    %v138 = vld [vmem:[%s128 + $0x48] sm:$0xff]
    %v139 = vld [vmem:[%s128 + $0x50] sm:$0xff]
    %v140 = vld [vmem:[%s128 + $0x58] sm:$0xff]
    %v141 = vld [vmem:[%s128 + $0x60] sm:$0xff]
    %v142 = vld [vmem:[%s128 + $0x68] sm:$0xff]
    %v143 = vld [vmem:[%s128 + $0x70] sm:$0xff]
    %v144 = vld [vmem:[%s128 + $0x78] sm:$0xff]
    %v145 = vld [vmem:[%s128 + $0x80] sm:$0xff]
    %v146 = vld [vmem:[%s128 + $0x88] sm:$0xff]
    %v147 = vld [vmem:[%s128 + $0x90] sm:$0xff]
    %v148 = vld [vmem:[%s128 + $0x98] sm:$0xff]
    %v149 = vld [vmem:[%s128 + $0xa0] sm:$0xff]
    %v150 = vld [vmem:[%s128 + $0xa8] sm:$0xff]
    %v151 = vld [vmem:[%s128 + $0xb0] sm:$0xff]
    %v152 = vld [vmem:[%s128 + $0xb8] sm:$0xff]
    %v153 = vld [vmem:[%s128 + $0xc0] sm:$0xff]
    %v154 = vld [vmem:[%s128 + $0xc8] sm:$0xff]
    %v155 = vld [vmem:[%s128 + $0xd0] sm:$0xff]
    %v156 = vld [vmem:[%s128 + $0xd8] sm:$0xff]
    %v157 = vld [vmem:[%s128 + $0xe0] sm:$0xff]
    %v158 = vld [vmem:[%s128 + $0xe8] sm:$0xff]
    %v159 = vld [vmem:[%s128 + $0xf0] sm:$0xff]
    %v160 = vld [vmem:[%s128 + $0xf8] sm:$0xff]
    %v161 = vld [vmem:[%s128 + $0x100] sm:$0xff]
    %v162 = vld [vmem:[%s128 + $0x108] sm:$0xff]
    %v163 = vld [vmem:[%s128 + $0x110] sm:$0xff]
    %v164 = vld [vmem:[%s128 + $0x118] sm:$0xff]
    %v165 = vld [vmem:[%s128 + $0x120] sm:$0xff]
    %v166 = vld [vmem:[%s128 + $0x128] sm:$0xff]
    %v167 = vld [vmem:[%s128 + $0x130] sm:$0xff]
    %v168 = vld [vmem:[%s128 + $0x138] sm:$0xff]
    %v169 = vld [vmem:[%s128 + $0x140] sm:$0xff]
    %v170 = vld [vmem:[%s128 + $0x148] sm:$0xff]
    %v171 = vld [vmem:[%s128 + $0x150] sm:$0xff]
    %v172 = vld [vmem:[%s128 + $0x158] sm:$0xff]
    %v173 = vld [vmem:[%s128 + $0x160] sm:$0xff]
    %v174 = vld [vmem:[%s128 + $0x168] sm:$0xff]
    %v175 = vld [vmem:[%s128 + $0x170] sm:$0xff]
    %v176 = vld [vmem:[%s128 + $0x178] sm:$0xff]
    %s177 = scalar_lea.vmem [#allocation8], 768
    %v178 = vld [vmem:[%s177] sm:$0xff]
    %v179 = vld [vmem:[%s177 + $0x8] sm:$0xff]
    %v180 = vld [vmem:[%s177 + $0x10] sm:$0xff]
    %v181 = vld [vmem:[%s177 + $0x18] sm:$0xff]
    %v182 = vld [vmem:[%s177 + $0x20] sm:$0xff]
    %v183 = vld [vmem:[%s177 + $0x28] sm:$0xff]
    %v184 = vld [vmem:[%s177 + $0x30] sm:$0xff]
    %v185 = vld [vmem:[%s177 + $0x38] sm:$0xff]
    %v186 = vld [vmem:[%s177 + $0x40] sm:$0xff]
    %v187 = vld [vmem:[%s177 + $0x48] sm:$0xff]
    %v188 = vld [vmem:[%s177 + $0x50] sm:$0xff]
    %v189 = vld [vmem:[%s177 + $0x58] sm:$0xff]
    %v190 = vld [vmem:[%s177 + $0x60] sm:$0xff]
    %v191 = vld [vmem:[%s177 + $0x68] sm:$0xff]
    %v192 = vld [vmem:[%s177 + $0x70] sm:$0xff]
    %v193 = vld [vmem:[%s177 + $0x78] sm:$0xff]
    %v194 = vld [vmem:[%s177 + $0x80] sm:$0xff]
    %v195 = vld [vmem:[%s177 + $0x88] sm:$0xff]
    %v196 = vld [vmem:[%s177 + $0x90] sm:$0xff]
    %v197 = vld [vmem:[%s177 + $0x98] sm:$0xff]
    %v198 = vld [vmem:[%s177 + $0xa0] sm:$0xff]
    %v199 = vld [vmem:[%s177 + $0xa8] sm:$0xff]
    %v200 = vld [vmem:[%s177 + $0xb0] sm:$0xff]
    %v201 = vld [vmem:[%s177 + $0xb8] sm:$0xff]
    %v202 = vld [vmem:[%s177 + $0xc0] sm:$0xff]
    %v203 = vld [vmem:[%s177 + $0xc8] sm:$0xff]
    %v204 = vld [vmem:[%s177 + $0xd0] sm:$0xff]
    %v205 = vld [vmem:[%s177 + $0xd8] sm:$0xff]
    %v206 = vld [vmem:[%s177 + $0xe0] sm:$0xff]
    %v207 = vld [vmem:[%s177 + $0xe8] sm:$0xff]
    %v208 = vld [vmem:[%s177 + $0xf0] sm:$0xff]
    %v209 = vld [vmem:[%s177 + $0xf8] sm:$0xff]
    %v210 = vld [vmem:[%s177 + $0x100] sm:$0xff]
    %v211 = vld [vmem:[%s177 + $0x108] sm:$0xff]
    %v212 = vld [vmem:[%s177 + $0x110] sm:$0xff]
    %v213 = vld [vmem:[%s177 + $0x118] sm:$0xff]
    %v214 = vld [vmem:[%s177 + $0x120] sm:$0xff]
    %v215 = vld [vmem:[%s177 + $0x128] sm:$0xff]
    %v216 = vld [vmem:[%s177 + $0x130] sm:$0xff]
    %v217 = vld [vmem:[%s177 + $0x138] sm:$0xff]
    %v218 = vld [vmem:[%s177 + $0x140] sm:$0xff]
    %v219 = vld [vmem:[%s177 + $0x148] sm:$0xff]
    %v220 = vld [vmem:[%s177 + $0x150] sm:$0xff]
    %v221 = vld [vmem:[%s177 + $0x158] sm:$0xff]
    %v222 = vld [vmem:[%s177 + $0x160] sm:$0xff]
    %v223 = vld [vmem:[%s177 + $0x168] sm:$0xff]
    %v224 = vld [vmem:[%s177 + $0x170] sm:$0xff]
    %v225 = vld [vmem:[%s177 + $0x178] sm:$0xff]
    %s226 = scalar_lea.vmem [#allocation8], 1152
    %v227 = vld [vmem:[%s226] sm:$0xff]
    %v228 = vld [vmem:[%s226 + $0x8] sm:$0xff]
    %v229 = vld [vmem:[%s226 + $0x18] sm:$0xff]
    %v230 = vld [vmem:[%s226 + $0x20] sm:$0xff]
    %v231 = vld [vmem:[%s226 + $0x30] sm:$0xff]
    %v232 = vld [vmem:[%s226 + $0x38] sm:$0xff]
    %v233 = vld [vmem:[%s226 + $0x48] sm:$0xff]
    %v234 = vld [vmem:[%s226 + $0x50] sm:$0xff]
    %v235 = vld [vmem:[%s226 + $0x60] sm:$0xff]
    %v236 = vld [vmem:[%s226 + $0x68] sm:$0xff]
    %v237 = vld [vmem:[%s226 + $0x78] sm:$0xff]
    %v238 = vld [vmem:[%s226 + $0x80] sm:$0xff]
    %v239 = vld [vmem:[%s226 + $0x90] sm:$0xff]
    %v240 = vld [vmem:[%s226 + $0x98] sm:$0xff]
    %v241 = vld [vmem:[%s226 + $0xa8] sm:$0xff]
    %v242 = vld [vmem:[%s226 + $0xb0] sm:$0xff]
    %v243 = vld [vmem:[%s226 + $0xc0] sm:$0xff]
    %v244 = vld [vmem:[%s226 + $0xc8] sm:$0xff]
    %v245 = vld [vmem:[%s226 + $0xd8] sm:$0xff]
    %v246 = vld [vmem:[%s226 + $0xe0] sm:$0xff]
    %v247 = vld [vmem:[%s226 + $0xf0] sm:$0xff]
    %v248 = vld [vmem:[%s226 + $0xf8] sm:$0xff]
    %v249 = vld [vmem:[%s226 + $0x108] sm:$0xff]
    %v250 = vld [vmem:[%s226 + $0x110] sm:$0xff]
    %v251 = vld [vmem:[%s226 + $0x120] sm:$0xff]
    %v252 = vld [vmem:[%s226 + $0x128] sm:$0xff]
    %v253 = vld [vmem:[%s226 + $0x138] sm:$0xff]
    %v254 = vld [vmem:[%s226 + $0x140] sm:$0xff]
    %v255 = vld [vmem:[%s226 + $0x150] sm:$0xff]
    %v256 = vld [vmem:[%s226 + $0x158] sm:$0xff]
    %v257 = vld [vmem:[%s226 + $0x168] sm:$0xff]
    %v258 = vld [vmem:[%s226 + $0x170] sm:$0xff]
    %v259 = vld [vmem:[%s4] sm:$0x77]
    %v260 = vld [vmem:[%s4 + $0x8] sm:$0x7]
    %v261 = vld [vmem:[#allocation7] sm:$0xff]
    %v262 = vld [vmem:[#allocation7 + $0x8] sm:$0xff]
    %v264 = vlaneseq
    %v265 = vshrl.u32 %v264, 7
    %v266 = vsub.s32 2, %v265
    %v267 = vrot.slane %v259, %v266
    %v268 = vlaneseq
    %v269 = vshrl.u32 %v268, 7
    %v270 = vsub.s32 6, %v269
    %v271 = vrot.slane %v259, %v270
    %v274 = vlaneseq
    %v275 = vshrl.u32 %v274, 7
    %v276 = vsub.s32 2, %v275
    %v277 = vrot.slane %v267, %v276
    %v278 = vlaneseq
    %v279 = vshrl.u32 %v278, 7
    %v280 = vsub.s32 2, %v279
    %v281 = vrot.slane %v271, %v280
    %282 = vmatprep.subr.mxu0 %v228
    %283 = vmatpush1.msra.mxu0 %v227
    %284 = vmatprep.subr.mxu0 %v230
    %285 = vmatpush1.msra.mxu0 %v229
    %286 = vmatprep.subr.mxu0 %v232
    %287 = vmatpush1.msra.mxu0 %v231
    %288 = vmatprep.subr.mxu0 %v234
    %289 = vmatpush1.msra.mxu0 %v233
    %290 = vmatprep.subr.mxu0 %v236
    %291 = vmatpush1.msra.mxu0 %v235
    %292 = vmatprep.subr.mxu0 %v238
    %293 = vmatpush1.msra.mxu0 %v237
    %294 = vmatprep.subr.mxu0 %v240
    %295 = vmatpush1.msra.mxu0 %v239
    %296 = vmatprep.subr.mxu0 %v242
    %297 = vmatpush1.msra.mxu0 %v241
    %298 = vmatprep.subr.mxu0 %v244
    %299 = vmatpush1.msra.mxu0 %v243
    %300 = vmatprep.subr.mxu0 %v246
    %301 = vmatpush1.msra.mxu0 %v245
    %302 = vmatprep.subr.mxu0 %v248
    %303 = vmatpush1.msra.mxu0 %v247
    %304 = vmatprep.subr.mxu0 %v250
    %305 = vmatpush1.msra.mxu0 %v249
    %306 = vmatprep.subr.mxu0 %v252
    %307 = vmatpush1.msra.mxu0 %v251
    %308 = vmatprep.subr.mxu0 %v254
    %309 = vmatpush1.msra.mxu0 %v253
    %310 = vmatprep.subr.mxu0 %v256
    %311 = vmatpush1.msra.mxu0 %v255
    %312 = vmatprep.subr.mxu0 %v258
    %313 = vmatpush1.msra.mxu0 %v257
    %314 = vmatprep.subr.mxu0 0.0
    %315 = vmatpush1.msra.mxu0 0.0
    %316 = vmatprep.subr.mxu0 0.0
    %317 = vmatpush1.msra.mxu0 0.0
    %318 = vmatprep.subr.mxu0 0.0
    %319 = vmatpush1.msra.mxu0 0.0
    %320 = vmatprep.subr.mxu0 0.0
    %321 = vmatpush1.msra.mxu0 0.0
    %322 = vmatprep.subr.mxu0 0.0
    %323 = vmatpush1.msra.mxu0 0.0
    %324 = vmatprep.subr.mxu0 0.0
    %325 = vmatpush1.msra.mxu0 0.0
    %326 = vmatprep.subr.mxu0 0.0
    %327 = vmatpush1.msra.mxu0 0.0
    %328 = vmatprep.subr.mxu0 0.0
    %329 = vmatpush1.msra.mxu0 0.0
    %330 = vmatprep.subr.mxu0 0.0
    %331 = vmatpush1.msra.mxu0 0.0
    %332 = vmatprep.subr.mxu0 0.0
    %333 = vmatpush1.msra.mxu0 0.0
    %334 = vmatprep.subr.mxu0 0.0
    %335 = vmatpush1.msra.mxu0 0.0
    %336 = vmatprep.subr.mxu0 0.0
    %337 = vmatpush1.msra.mxu0 0.0
    %338 = vmatprep.subr.mxu0 0.0
    %339 = vmatpush1.msra.mxu0 0.0
    %340 = vmatprep.subr.mxu0 0.0
    %341 = vmatpush1.msra.mxu0 0.0
    %342 = vmatprep.subr.mxu0 0.0
    %343 = vmatpush1.msra.mxu0 0.0
    %344 = vmatprep.subr.mxu0 0.0
    %345 = vmatpush1.msra.mxu0 0.0
    %346 = vmatprep.mubr.f32.mxu0 0.0
    %347 = vmatmul.mubr.f32.gmra.mrb[0].mxu0 %v261
    %v348 = vpop.f32.mrb[0].mxu0
    %v349 = vadd.f32 %v277, %v348
    %v350 = vpop.f32.mrb[0].mxu0
    %v351 = vadd.f32 %v281, %v350
    %352 = vmatprep.mubr.f32.mxu0 0.0
    %353 = vmatmul.mubr.f32.gmra.mrb[0].mxu0 %v262
    %v354 = vpop.f32.mrb[0].mxu0
    %v355 = vadd.f32 %v277, %v354
    %v356 = vpop.f32.mrb[0].mxu0
    %v357 = vadd.f32 %v281, %v356
    %358 = vdwg.mxu0
    %vm359 = vcmask 130048
    %v361 = vsel %vm359, %v76, 0
    %v364 = vsel %vm359, %v77, 0
    %366 = vmatprep.subr.mxu0 0.0
    %367 = vmatpush1.msra.mxu0 %v349
    %368 = vmatprep.subr.mxu0 0.0
    %369 = vmatpush1.msra.mxu0 %v355
    %370 = vmatprep.subr.mxu0 0.0
    %371 = vmatpush1.msra.mxu0 0.0
    %372 = vmatprep.subr.mxu0 0.0
    %373 = vmatpush1.msra.mxu0 0.0
    %374 = vmatprep.subr.mxu0 0.0
    %375 = vmatpush1.msra.mxu0 0.0
    %376 = vmatprep.subr.mxu0 0.0
    %377 = vmatpush1.msra.mxu0 0.0
    %378 = vmatprep.subr.mxu0 0.0
    %379 = vmatpush1.msra.mxu0 0.0
    %380 = vmatprep.subr.mxu0 0.0
    %381 = vmatpush1.msra.mxu0 0.0
    %382 = vmatprep.subr.mxu0 0.0
    %383 = vmatpush1.msra.mxu0 0.0
    %384 = vmatprep.subr.mxu0 0.0
    %385 = vmatpush1.msra.mxu0 0.0
    %386 = vmatprep.subr.mxu0 0.0
    %387 = vmatpush1.msra.mxu0 0.0
    %388 = vmatprep.subr.mxu0 0.0
    %389 = vmatpush1.msra.mxu0 0.0
    %390 = vmatprep.subr.mxu0 0.0
    %391 = vmatpush1.msra.mxu0 0.0
    %392 = vmatprep.subr.mxu0 0.0
    %393 = vmatpush1.msra.mxu0 0.0
    %394 = vmatprep.subr.mxu0 0.0
    %395 = vmatpush1.msra.mxu0 0.0
    %396 = vmatprep.subr.mxu0 0.0
    %397 = vmatpush1.msra.mxu0 0.0
    %398 = vmatprep.subr.mxu0 0.0
    %399 = vmatpush1.msra.mxu0 0.0
    %400 = vmatprep.subr.mxu0 0.0
    %401 = vmatpush1.msra.mxu0 0.0
    %402 = vmatprep.subr.mxu0 0.0
    %403 = vmatpush1.msra.mxu0 0.0
    %404 = vmatprep.subr.mxu0 0.0
    %405 = vmatpush1.msra.mxu0 0.0
    %406 = vmatprep.subr.mxu0 0.0
    %407 = vmatpush1.msra.mxu0 0.0
    %408 = vmatprep.subr.mxu0 0.0
    %409 = vmatpush1.msra.mxu0 0.0
    %410 = vmatprep.subr.mxu0 0.0
    %411 = vmatpush1.msra.mxu0 0.0
    %412 = vmatprep.subr.mxu0 0.0
    %413 = vmatpush1.msra.mxu0 0.0
    %414 = vmatprep.subr.mxu0 0.0
    %415 = vmatpush1.msra.mxu0 0.0
    %416 = vmatprep.subr.mxu0 0.0
    %417 = vmatpush1.msra.mxu0 0.0
    %418 = vmatprep.subr.mxu0 0.0
    %419 = vmatpush1.msra.mxu0 0.0
    %420 = vmatprep.subr.mxu0 0.0
    %421 = vmatpush1.msra.mxu0 0.0
    %422 = vmatprep.subr.mxu0 0.0
    %423 = vmatpush1.msra.mxu0 0.0
    %424 = vmatprep.subr.mxu0 0.0
    %425 = vmatpush1.msra.mxu0 0.0
    %426 = vmatprep.subr.mxu0 0.0
    %427 = vmatpush1.msra.mxu0 0.0
    %428 = vmatprep.subr.mxu0 0.0
    %429 = vmatpush1.msra.mxu0 0.0
    %430 = vmatprep.mubr.f32.mxu0 0.0
    %431 = vmatmul.mubr.f32.gmra.mrb[0].mxu0 %v361
    %v432 = vpop.f32.mrb[0].mxu0
    %v433 = vadd.f32 0.0, %v432
    %v434 = vpop.f32.mrb[0].mxu0
    %435 = vmatprep.mubr.f32.mxu0 0.0
    %436 = vmatmul.mubr.f32.gmra.mrb[0].mxu0 %v364
    %v437 = vpop.f32.mrb[0].mxu0
    %v438 = vadd.f32 0.0, %v437
    %v439 = vpop.f32.mrb[0].mxu0
    %440 = vdwg.mxu0
    %v442 = vsel %vm359, %v78, 0
    %v445 = vsel %vm359, %v79, 0
    %447 = vmatprep.subr.mxu0 0.0
    %448 = vmatpush1.msra.mxu0 %v351
    %449 = vmatprep.subr.mxu0 0.0
    %450 = vmatpush1.msra.mxu0 %v357
    %451 = vmatprep.subr.mxu0 0.0
    %452 = vmatpush1.msra.mxu0 0.0
    %453 = vmatprep.subr.mxu0 0.0
    %454 = vmatpush1.msra.mxu0 0.0
    %455 = vmatprep.subr.mxu0 0.0
    %456 = vmatpush1.msra.mxu0 0.0
    %457 = vmatprep.subr.mxu0 0.0
    %458 = vmatpush1.msra.mxu0 0.0
    %459 = vmatprep.subr.mxu0 0.0
    %460 = vmatpush1.msra.mxu0 0.0
    %461 = vmatprep.subr.mxu0 0.0
    %462 = vmatpush1.msra.mxu0 0.0
    %463 = vmatprep.subr.mxu0 0.0
    %464 = vmatpush1.msra.mxu0 0.0
    %465 = vmatprep.subr.mxu0 0.0
    %466 = vmatpush1.msra.mxu0 0.0
    %467 = vmatprep.subr.mxu0 0.0
    %468 = vmatpush1.msra.mxu0 0.0
    %469 = vmatprep.subr.mxu0 0.0
    %470 = vmatpush1.msra.mxu0 0.0
    %471 = vmatprep.subr.mxu0 0.0
    %472 = vmatpush1.msra.mxu0 0.0
    %473 = vmatprep.subr.mxu0 0.0
    %474 = vmatpush1.msra.mxu0 0.0
    %475 = vmatprep.subr.mxu0 0.0
    %476 = vmatpush1.msra.mxu0 0.0
    %477 = vmatprep.subr.mxu0 0.0
    %478 = vmatpush1.msra.mxu0 0.0
    %479 = vmatprep.subr.mxu0 0.0
    %480 = vmatpush1.msra.mxu0 0.0
    %481 = vmatprep.subr.mxu0 0.0
    %482 = vmatpush1.msra.mxu0 0.0
    %483 = vmatprep.subr.mxu0 0.0
    %484 = vmatpush1.msra.mxu0 0.0
    %485 = vmatprep.subr.mxu0 0.0
    %486 = vmatpush1.msra.mxu0 0.0
    %487 = vmatprep.subr.mxu0 0.0
    %488 = vmatpush1.msra.mxu0 0.0
    %489 = vmatprep.subr.mxu0 0.0
    %490 = vmatpush1.msra.mxu0 0.0
    %491 = vmatprep.subr.mxu0 0.0
    %492 = vmatpush1.msra.mxu0 0.0
    %493 = vmatprep.subr.mxu0 0.0
    %494 = vmatpush1.msra.mxu0 0.0
    %495 = vmatprep.subr.mxu0 0.0
    %496 = vmatpush1.msra.mxu0 0.0
    %497 = vmatprep.subr.mxu0 0.0
    %498 = vmatpush1.msra.mxu0 0.0
    %499 = vmatprep.subr.mxu0 0.0
    %500 = vmatpush1.msra.mxu0 0.0
    %501 = vmatprep.subr.mxu0 0.0
    %502 = vmatpush1.msra.mxu0 0.0
    %503 = vmatprep.subr.mxu0 0.0
    %504 = vmatpush1.msra.mxu0 0.0
    %505 = vmatprep.subr.mxu0 0.0
    %506 = vmatpush1.msra.mxu0 0.0
    %507 = vmatprep.subr.mxu0 0.0
    %508 = vmatpush1.msra.mxu0 0.0
    %509 = vmatprep.subr.mxu0 0.0
    %510 = vmatpush1.msra.mxu0 0.0
    %511 = vmatprep.mubr.f32.mxu0 0.0
    %512 = vmatmul.mubr.f32.gmra.mrb[0].mxu0 %v442
    %v513 = vpop.f32.mrb[0].mxu0
    %v514 = vadd.f32 0.0, %v513
    %v515 = vpop.f32.mrb[0].mxu0
    %516 = vmatprep.mubr.f32.mxu0 0.0
    %517 = vmatmul.mubr.f32.gmra.mrb[0].mxu0 %v445
    %v518 = vpop.f32.mrb[0].mxu0
    %v519 = vadd.f32 0.0, %v518
    %v520 = vpop.f32.mrb[0].mxu0
    %521 = vdwg.mxu0
    %522 = vmatprep.subr.mxu0 %v130
    %523 = vmatpush1.msra.mxu0 %v129
    %524 = vmatprep.subr.mxu0 %v133
    %525 = vmatpush1.msra.mxu0 %v132
    %526 = vmatprep.subr.mxu0 %v136
    %527 = vmatpush1.msra.mxu0 %v135
    %528 = vmatprep.subr.mxu0 %v139
    %529 = vmatpush1.msra.mxu0 %v138
    %530 = vmatprep.subr.mxu0 %v142
    %531 = vmatpush1.msra.mxu0 %v141
    %532 = vmatprep.subr.mxu0 %v145
    %533 = vmatpush1.msra.mxu0 %v144
    %534 = vmatprep.subr.mxu0 %v148
    %535 = vmatpush1.msra.mxu0 %v147
    %536 = vmatprep.subr.mxu0 %v151
    %537 = vmatpush1.msra.mxu0 %v150
    %538 = vmatprep.subr.mxu0 %v154
    %539 = vmatpush1.msra.mxu0 %v153
    %540 = vmatprep.subr.mxu0 %v157
    %541 = vmatpush1.msra.mxu0 %v156
    %542 = vmatprep.subr.mxu0 %v160
    %543 = vmatpush1.msra.mxu0 %v159
    %544 = vmatprep.subr.mxu0 %v163
    %545 = vmatpush1.msra.mxu0 %v162
    %546 = vmatprep.subr.mxu0 %v166
    %547 = vmatpush1.msra.mxu0 %v165
    %548 = vmatprep.subr.mxu0 %v169
    %549 = vmatpush1.msra.mxu0 %v168
    %550 = vmatprep.subr.mxu0 %v172
    %551 = vmatpush1.msra.mxu0 %v171
    %552 = vmatprep.subr.mxu0 %v175
    %553 = vmatpush1.msra.mxu0 %v174
    %554 = vmatprep.subr.mxu0 0.0
    %555 = vmatpush1.msra.mxu0 0.0
    %556 = vmatprep.subr.mxu0 0.0
    %557 = vmatpush1.msra.mxu0 0.0
    %558 = vmatprep.subr.mxu0 0.0
    %559 = vmatpush1.msra.mxu0 0.0
    %560 = vmatprep.subr.mxu0 0.0
    %561 = vmatpush1.msra.mxu0 0.0
    %562 = vmatprep.subr.mxu0 0.0
    %563 = vmatpush1.msra.mxu0 0.0
    %564 = vmatprep.subr.mxu0 0.0
    %565 = vmatpush1.msra.mxu0 0.0
    %566 = vmatprep.subr.mxu0 0.0
    %567 = vmatpush1.msra.mxu0 0.0
    %568 = vmatprep.subr.mxu0 0.0
    %569 = vmatpush1.msra.mxu0 0.0
    %570 = vmatprep.subr.mxu0 0.0
    %571 = vmatpush1.msra.mxu0 0.0
    %572 = vmatprep.subr.mxu0 0.0
    %573 = vmatpush1.msra.mxu0 0.0
    %574 = vmatprep.subr.mxu0 0.0
    %575 = vmatpush1.msra.mxu0 0.0
    %576 = vmatprep.subr.mxu0 0.0
    %577 = vmatpush1.msra.mxu0 0.0
    %578 = vmatprep.subr.mxu0 0.0
    %579 = vmatpush1.msra.mxu0 0.0
    %580 = vmatprep.subr.mxu0 0.0
    %581 = vmatpush1.msra.mxu0 0.0
    %582 = vmatprep.subr.mxu0 0.0
    %583 = vmatpush1.msra.mxu0 0.0
    %584 = vmatprep.subr.mxu0 0.0
    %585 = vmatpush1.msra.mxu0 0.0
    %586 = vmatprep.mubr.f32.mxu0 0.0
    %587 = vmatmul.mubr.f32.gmra.mrb[0].mxu0 %v514
    %v588 = vpop.f32.mrb[0].mxu0
    %v589 = vadd.f32 0.0, %v588
    %v590 = vpop.f32.mrb[0].mxu0
    %v591 = vadd.f32 0.0, %v590
    %592 = vmatprep.mubr.f32.mxu0 0.0
    %593 = vmatmul.mubr.f32.gmra.mrb[0].mxu0 %v519
    %v594 = vpop.f32.mrb[0].mxu0
    %v595 = vadd.f32 0.0, %v594
    %v596 = vpop.f32.mrb[0].mxu0
    %v597 = vadd.f32 0.0, %v596
    %598 = vdwg.mxu0
    %599 = vmatprep.subr.mxu0 0.0
    %600 = vmatpush1.msra.mxu0 %v131
    %601 = vmatprep.subr.mxu0 0.0
    %602 = vmatpush1.msra.mxu0 %v134
    %603 = vmatprep.subr.mxu0 0.0
    %604 = vmatpush1.msra.mxu0 %v137
    %605 = vmatprep.subr.mxu0 0.0
    %606 = vmatpush1.msra.mxu0 %v140
    %607 = vmatprep.subr.mxu0 0.0
    %608 = vmatpush1.msra.mxu0 %v143
    %609 = vmatprep.subr.mxu0 0.0
    %610 = vmatpush1.msra.mxu0 %v146
    %611 = vmatprep.subr.mxu0 0.0
    %612 = vmatpush1.msra.mxu0 %v149
    %613 = vmatprep.subr.mxu0 0.0
    %614 = vmatpush1.msra.mxu0 %v152
    %615 = vmatprep.subr.mxu0 0.0
    %616 = vmatpush1.msra.mxu0 %v155
    %617 = vmatprep.subr.mxu0 0.0
    %618 = vmatpush1.msra.mxu0 %v158
    %619 = vmatprep.subr.mxu0 0.0
    %620 = vmatpush1.msra.mxu0 %v161
    %621 = vmatprep.subr.mxu0 0.0
    %622 = vmatpush1.msra.mxu0 %v164
    %623 = vmatprep.subr.mxu0 0.0
    %624 = vmatpush1.msra.mxu0 %v167
    %625 = vmatprep.subr.mxu0 0.0
    %626 = vmatpush1.msra.mxu0 %v170
    %627 = vmatprep.subr.mxu0 0.0
    %628 = vmatpush1.msra.mxu0 %v173
    %629 = vmatprep.subr.mxu0 0.0
    %630 = vmatpush1.msra.mxu0 %v176
    %631 = vmatprep.subr.mxu0 0.0
    %632 = vmatpush1.msra.mxu0 0.0
    %633 = vmatprep.subr.mxu0 0.0
    %634 = vmatpush1.msra.mxu0 0.0
    %635 = vmatprep.subr.mxu0 0.0
    %636 = vmatpush1.msra.mxu0 0.0
    %637 = vmatprep.subr.mxu0 0.0
    %638 = vmatpush1.msra.mxu0 0.0
    %639 = vmatprep.subr.mxu0 0.0
    %640 = vmatpush1.msra.mxu0 0.0
    %641 = vmatprep.subr.mxu0 0.0
    %642 = vmatpush1.msra.mxu0 0.0
    %643 = vmatprep.subr.mxu0 0.0
    %644 = vmatpush1.msra.mxu0 0.0
    %645 = vmatprep.subr.mxu0 0.0
    %646 = vmatpush1.msra.mxu0 0.0
    %647 = vmatprep.subr.mxu0 0.0
    %648 = vmatpush1.msra.mxu0 0.0
    %649 = vmatprep.subr.mxu0 0.0
    %650 = vmatpush1.msra.mxu0 0.0
    %651 = vmatprep.subr.mxu0 0.0
    %652 = vmatpush1.msra.mxu0 0.0
    %653 = vmatprep.subr.mxu0 0.0
    %654 = vmatpush1.msra.mxu0 0.0
    %655 = vmatprep.subr.mxu0 0.0
    %656 = vmatpush1.msra.mxu0 0.0
    %657 = vmatprep.subr.mxu0 0.0
    %658 = vmatpush1.msra.mxu0 0.0
    %659 = vmatprep.subr.mxu0 0.0
    %660 = vmatpush1.msra.mxu0 0.0
    %661 = vmatprep.subr.mxu0 0.0
    %662 = vmatpush1.msra.mxu0 0.0
    %663 = vmatprep.mubr.f32.mxu0 0.0
    %664 = vmatmul.mubr.f32.gmra.mrb[0].mxu0 %v514
    %v665 = vpop.f32.mrb[0].mxu0
    %v666 = vadd.f32 0.0, %v665
    %v667 = vpop.f32.mrb[0].mxu0
    %668 = vmatprep.mubr.f32.mxu0 0.0
    %669 = vmatmul.mubr.f32.gmra.mrb[0].mxu0 %v519
    %v670 = vpop.f32.mrb[0].mxu0
    %v671 = vadd.f32 0.0, %v670
    %v672 = vpop.f32.mrb[0].mxu0
    %673 = vdwg.mxu0
    %674 = vmatprep.subr.mxu0 %v81
    %675 = vmatpush1.msra.mxu0 %v80
    %676 = vmatprep.subr.mxu0 %v84
    %677 = vmatpush1.msra.mxu0 %v83
    %678 = vmatprep.subr.mxu0 %v87
    %679 = vmatpush1.msra.mxu0 %v86
    %680 = vmatprep.subr.mxu0 %v90
    %681 = vmatpush1.msra.mxu0 %v89
    %682 = vmatprep.subr.mxu0 %v93
    %683 = vmatpush1.msra.mxu0 %v92
    %684 = vmatprep.subr.mxu0 %v96
    %685 = vmatpush1.msra.mxu0 %v95
    %686 = vmatprep.subr.mxu0 %v99
    %687 = vmatpush1.msra.mxu0 %v98
    %688 = vmatprep.subr.mxu0 %v102
    %689 = vmatpush1.msra.mxu0 %v101
    %690 = vmatprep.subr.mxu0 %v105
    %691 = vmatpush1.msra.mxu0 %v104
    %692 = vmatprep.subr.mxu0 %v108
    %693 = vmatpush1.msra.mxu0 %v107
    %694 = vmatprep.subr.mxu0 %v111
    %695 = vmatpush1.msra.mxu0 %v110
    %696 = vmatprep.subr.mxu0 %v114
    %697 = vmatpush1.msra.mxu0 %v113
    %698 = vmatprep.subr.mxu0 %v117
    %699 = vmatpush1.msra.mxu0 %v116
    %700 = vmatprep.subr.mxu0 %v120
    %701 = vmatpush1.msra.mxu0 %v119
    %702 = vmatprep.subr.mxu0 %v123
    %703 = vmatpush1.msra.mxu0 %v122
    %704 = vmatprep.subr.mxu0 %v126
    %705 = vmatpush1.msra.mxu0 %v125
    %706 = vmatprep.subr.mxu0 0.0
    %707 = vmatpush1.msra.mxu0 0.0
    %708 = vmatprep.subr.mxu0 0.0
    %709 = vmatpush1.msra.mxu0 0.0
    %710 = vmatprep.subr.mxu0 0.0
    %711 = vmatpush1.msra.mxu0 0.0
    %712 = vmatprep.subr.mxu0 0.0
    %713 = vmatpush1.msra.mxu0 0.0
    %714 = vmatprep.subr.mxu0 0.0
    %715 = vmatpush1.msra.mxu0 0.0
    %716 = vmatprep.subr.mxu0 0.0
    %717 = vmatpush1.msra.mxu0 0.0
    %718 = vmatprep.subr.mxu0 0.0
    %719 = vmatpush1.msra.mxu0 0.0
    %720 = vmatprep.subr.mxu0 0.0
    %721 = vmatpush1.msra.mxu0 0.0
    %722 = vmatprep.subr.mxu0 0.0
    %723 = vmatpush1.msra.mxu0 0.0
    %724 = vmatprep.subr.mxu0 0.0
    %725 = vmatpush1.msra.mxu0 0.0
    %726 = vmatprep.subr.mxu0 0.0
    %727 = vmatpush1.msra.mxu0 0.0
    %728 = vmatprep.subr.mxu0 0.0
    %729 = vmatpush1.msra.mxu0 0.0
    %730 = vmatprep.subr.mxu0 0.0
    %731 = vmatpush1.msra.mxu0 0.0
    %732 = vmatprep.subr.mxu0 0.0
    %733 = vmatpush1.msra.mxu0 0.0
    %734 = vmatprep.subr.mxu0 0.0
    %735 = vmatpush1.msra.mxu0 0.0
    %736 = vmatprep.subr.mxu0 0.0
    %737 = vmatpush1.msra.mxu0 0.0
    %738 = vmatprep.mubr.f32.mxu0 0.0
    %739 = vmatmul.mubr.f32.gmra.mrb[0].mxu0 %v433
    %v740 = vpop.f32.mrb[0].mxu0
    %v741 = vadd.f32 %v589, %v740
    %v742 = vpop.f32.mrb[0].mxu0
    %v743 = vadd.f32 %v591, %v742
    %744 = vmatprep.mubr.f32.mxu0 0.0
    %745 = vmatmul.mubr.f32.gmra.mrb[0].mxu0 %v438
    %v746 = vpop.f32.mrb[0].mxu0
    %v747 = vadd.f32 %v595, %v746
    %v748 = vpop.f32.mrb[0].mxu0
    %v749 = vadd.f32 %v597, %v748
    %750 = vdwg.mxu0
    %751 = vmatprep.subr.mxu0 0.0
    %752 = vmatpush1.msra.mxu0 %v82
    %753 = vmatprep.subr.mxu0 0.0
    %754 = vmatpush1.msra.mxu0 %v85
    %755 = vmatprep.subr.mxu0 0.0
    %756 = vmatpush1.msra.mxu0 %v88
    %757 = vmatprep.subr.mxu0 0.0
    %758 = vmatpush1.msra.mxu0 %v91
    %759 = vmatprep.subr.mxu0 0.0
    %760 = vmatpush1.msra.mxu0 %v94
    %761 = vmatprep.subr.mxu0 0.0
    %762 = vmatpush1.msra.mxu0 %v97
    %763 = vmatprep.subr.mxu0 0.0
    %764 = vmatpush1.msra.mxu0 %v100
    %765 = vmatprep.subr.mxu0 0.0
    %766 = vmatpush1.msra.mxu0 %v103
    %767 = vmatprep.subr.mxu0 0.0
    %768 = vmatpush1.msra.mxu0 %v106
    %769 = vmatprep.subr.mxu0 0.0
    %770 = vmatpush1.msra.mxu0 %v109
    %771 = vmatprep.subr.mxu0 0.0
    %772 = vmatpush1.msra.mxu0 %v112
    %773 = vmatprep.subr.mxu0 0.0
    %774 = vmatpush1.msra.mxu0 %v115
    %775 = vmatprep.subr.mxu0 0.0
    %776 = vmatpush1.msra.mxu0 %v118
    %777 = vmatprep.subr.mxu0 0.0
    %778 = vmatpush1.msra.mxu0 %v121
    %779 = vmatprep.subr.mxu0 0.0
    %780 = vmatpush1.msra.mxu0 %v124
    %781 = vmatprep.subr.mxu0 0.0
    %782 = vmatpush1.msra.mxu0 %v127
    %783 = vmatprep.subr.mxu0 0.0
    %784 = vmatpush1.msra.mxu0 0.0
    %785 = vmatprep.subr.mxu0 0.0
    %786 = vmatpush1.msra.mxu0 0.0
    %787 = vmatprep.subr.mxu0 0.0
    %788 = vmatpush1.msra.mxu0 0.0
    %789 = vmatprep.subr.mxu0 0.0
    %790 = vmatpush1.msra.mxu0 0.0
    %791 = vmatprep.subr.mxu0 0.0
    %792 = vmatpush1.msra.mxu0 0.0
    %793 = vmatprep.subr.mxu0 0.0
    %794 = vmatpush1.msra.mxu0 0.0
    %795 = vmatprep.subr.mxu0 0.0
    %796 = vmatpush1.msra.mxu0 0.0
    %797 = vmatprep.subr.mxu0 0.0
    %798 = vmatpush1.msra.mxu0 0.0
    %799 = vmatprep.subr.mxu0 0.0
    %800 = vmatpush1.msra.mxu0 0.0
    %801 = vmatprep.subr.mxu0 0.0
    %802 = vmatpush1.msra.mxu0 0.0
    %803 = vmatprep.subr.mxu0 0.0
    %804 = vmatpush1.msra.mxu0 0.0
    %805 = vmatprep.subr.mxu0 0.0
    %806 = vmatpush1.msra.mxu0 0.0
    %807 = vmatprep.subr.mxu0 0.0
    %808 = vmatpush1.msra.mxu0 0.0
    %809 = vmatprep.subr.mxu0 0.0
    %810 = vmatpush1.msra.mxu0 0.0
    %811 = vmatprep.subr.mxu0 0.0
    %812 = vmatpush1.msra.mxu0 0.0
    %813 = vmatprep.subr.mxu0 0.0
    %814 = vmatpush1.msra.mxu0 0.0
    %815 = vmatprep.mubr.f32.mxu0 0.0
    %816 = vmatmul.mubr.f32.gmra.mrb[0].mxu0 %v433
    %v817 = vpop.f32.mrb[0].mxu0
    %v818 = vadd.f32 %v666, %v817
    %v819 = vpop.f32.mrb[0].mxu0
    %820 = vmatprep.mubr.f32.mxu0 0.0
    %821 = vmatmul.mubr.f32.gmra.mrb[0].mxu0 %v438
    %v822 = vpop.f32.mrb[0].mxu0
    %v823 = vadd.f32 %v671, %v822
    %v824 = vpop.f32.mrb[0].mxu0
    %825 = vdwg.mxu0
    %v827 = vlaneseq
    %v828 = vshrl.u32 %v827, 7
    %v829 = vsub.s32 0, %v828
    %v830 = vrot.slane %v259, %v829
    %v831 = vlaneseq
    %v832 = vshrl.u32 %v831, 7
    %v833 = vsub.s32 4, %v832
    %v834 = vrot.slane %v259, %v833
    %v835 = vlaneseq
    %v836 = vshrl.u32 %v835, 7
    %v837 = vsub.s32 0, %v836
    %v838 = vrot.slane %v260, %v837
    %v842 = vlaneseq
    %v843 = vshrl.u32 %v842, 7
    %v844 = vsub.s32 0, %v843
    %v845 = vrot.slane %v830, %v844
    %v846 = vlaneseq
    %v847 = vshrl.u32 %v846, 7
    %v848 = vsub.s32 0, %v847
    %v849 = vrot.slane %v834, %v848
    %v850 = vlaneseq
    %v851 = vshrl.u32 %v850, 7
    %v852 = vsub.s32 0, %v851
    %v853 = vrot.slane %v838, %v852
    %v854 = vadd.f32 %v741, %v845
    %v855 = vadd.f32 %v743, %v849
    %v856 = vadd.f32 %v818, %v853
    %v857 = vadd.f32 %v747, %v845
    %v858 = vadd.f32 %v749, %v849
    %v859 = vadd.f32 %v823, %v853
    %v860 = vlaneseq
    %v861 = vshrl.u32 %v860, 7
    %v862 = vsub.s32 1, %v861
    %v863 = vrot.slane %v259, %v862
    %v864 = vlaneseq
    %v865 = vshrl.u32 %v864, 7
    %v866 = vsub.s32 5, %v865
    %v867 = vrot.slane %v259, %v866
    %v868 = vlaneseq
    %v869 = vshrl.u32 %v868, 7
    %v870 = vsub.s32 1, %v869
    %v871 = vrot.slane %v260, %v870
    %v875 = vlaneseq
    %v876 = vshrl.u32 %v875, 7
    %v877 = vsub.s32 1, %v876
    %v878 = vrot.slane %v863, %v877
    %v879 = vlaneseq
    %v880 = vshrl.u32 %v879, 7
    %v881 = vsub.s32 1, %v880
    %v882 = vrot.slane %v867, %v881
    %v883 = vlaneseq
    %v884 = vshrl.u32 %v883, 7
    %v885 = vsub.s32 1, %v884
    %v886 = vrot.slane %v871, %v885
    %887 = vmatprep.subr.mxu0 %v179
    %888 = vmatpush1.msra.mxu0 %v178
    %889 = vmatprep.subr.mxu0 %v182
    %890 = vmatpush1.msra.mxu0 %v181
    %891 = vmatprep.subr.mxu0 %v185
    %892 = vmatpush1.msra.mxu0 %v184
    %893 = vmatprep.subr.mxu0 %v188
    %894 = vmatpush1.msra.mxu0 %v187
    %895 = vmatprep.subr.mxu0 %v191
    %896 = vmatpush1.msra.mxu0 %v190
    %897 = vmatprep.subr.mxu0 %v194
    %898 = vmatpush1.msra.mxu0 %v193
    %899 = vmatprep.subr.mxu0 %v197
    %900 = vmatpush1.msra.mxu0 %v196
    %901 = vmatprep.subr.mxu0 %v200
    %902 = vmatpush1.msra.mxu0 %v199
    %903 = vmatprep.subr.mxu0 %v203
    %904 = vmatpush1.msra.mxu0 %v202
    %905 = vmatprep.subr.mxu0 %v206
    %906 = vmatpush1.msra.mxu0 %v205
    %907 = vmatprep.subr.mxu0 %v209
    %908 = vmatpush1.msra.mxu0 %v208
    %909 = vmatprep.subr.mxu0 %v212
    %910 = vmatpush1.msra.mxu0 %v211
    %911 = vmatprep.subr.mxu0 %v215
    %912 = vmatpush1.msra.mxu0 %v214
    %913 = vmatprep.subr.mxu0 %v218
    %914 = vmatpush1.msra.mxu0 %v217
    %915 = vmatprep.subr.mxu0 %v221
    %916 = vmatpush1.msra.mxu0 %v220
    %917 = vmatprep.subr.mxu0 %v224
    %918 = vmatpush1.msra.mxu0 %v223
    %919 = vmatprep.subr.mxu0 0.0
    %920 = vmatpush1.msra.mxu0 0.0
    %921 = vmatprep.subr.mxu0 0.0
    %922 = vmatpush1.msra.mxu0 0.0
    %923 = vmatprep.subr.mxu0 0.0
    %924 = vmatpush1.msra.mxu0 0.0
    %925 = vmatprep.subr.mxu0 0.0
    %926 = vmatpush1.msra.mxu0 0.0
    %927 = vmatprep.subr.mxu0 0.0
    %928 = vmatpush1.msra.mxu0 0.0
    %929 = vmatprep.subr.mxu0 0.0
    %930 = vmatpush1.msra.mxu0 0.0
    %931 = vmatprep.subr.mxu0 0.0
    %932 = vmatpush1.msra.mxu0 0.0
    %933 = vmatprep.subr.mxu0 0.0
    %934 = vmatpush1.msra.mxu0 0.0
    %935 = vmatprep.subr.mxu0 0.0
    %936 = vmatpush1.msra.mxu0 0.0
    %937 = vmatprep.subr.mxu0 0.0
    %938 = vmatpush1.msra.mxu0 0.0
    %939 = vmatprep.subr.mxu0 0.0
    %940 = vmatpush1.msra.mxu0 0.0
    %941 = vmatprep.subr.mxu0 0.0
    %942 = vmatpush1.msra.mxu0 0.0
    %943 = vmatprep.subr.mxu0 0.0
    %944 = vmatpush1.msra.mxu0 0.0
    %945 = vmatprep.subr.mxu0 0.0
    %946 = vmatpush1.msra.mxu0 0.0
    %947 = vmatprep.subr.mxu0 0.0
    %948 = vmatpush1.msra.mxu0 0.0
    %949 = vmatprep.subr.mxu0 0.0
    %950 = vmatpush1.msra.mxu0 0.0
    %951 = vmatprep.mubr.f32.mxu0 0.0
    %952 = vmatmul.mubr.f32.gmra.mrb[0].mxu0 %v261
    %v953 = vpop.f32.mrb[0].mxu0
    %v954 = vadd.f32 %v878, %v953
    %v955 = vpop.f32.mrb[0].mxu0
    %v956 = vadd.f32 %v882, %v955
    %957 = vmatprep.mubr.f32.mxu0 0.0
    %958 = vmatmul.mubr.f32.gmra.mrb[0].mxu0 %v262
    %v959 = vpop.f32.mrb[0].mxu0
    %v960 = vadd.f32 %v878, %v959
    %v961 = vpop.f32.mrb[0].mxu0
    %v962 = vadd.f32 %v882, %v961
    %963 = vdwg.mxu0
    %964 = vmatprep.subr.mxu0 0.0
    %965 = vmatpush1.msra.mxu0 %v180
    %966 = vmatprep.subr.mxu0 0.0
    %967 = vmatpush1.msra.mxu0 %v183
    %968 = vmatprep.subr.mxu0 0.0
    %969 = vmatpush1.msra.mxu0 %v186
    %970 = vmatprep.subr.mxu0 0.0
    %971 = vmatpush1.msra.mxu0 %v189
    %972 = vmatprep.subr.mxu0 0.0
    %973 = vmatpush1.msra.mxu0 %v192
    %974 = vmatprep.subr.mxu0 0.0
    %975 = vmatpush1.msra.mxu0 %v195
    %976 = vmatprep.subr.mxu0 0.0
    %977 = vmatpush1.msra.mxu0 %v198
    %978 = vmatprep.subr.mxu0 0.0
    %979 = vmatpush1.msra.mxu0 %v201
    %980 = vmatprep.subr.mxu0 0.0
    %981 = vmatpush1.msra.mxu0 %v204
    %982 = vmatprep.subr.mxu0 0.0
    %983 = vmatpush1.msra.mxu0 %v207
    %984 = vmatprep.subr.mxu0 0.0
    %985 = vmatpush1.msra.mxu0 %v210
    %986 = vmatprep.subr.mxu0 0.0
    %987 = vmatpush1.msra.mxu0 %v213
    %988 = vmatprep.subr.mxu0 0.0
    %989 = vmatpush1.msra.mxu0 %v216
    %990 = vmatprep.subr.mxu0 0.0
    %991 = vmatpush1.msra.mxu0 %v219
    %992 = vmatprep.subr.mxu0 0.0
    %993 = vmatpush1.msra.mxu0 %v222
    %994 = vmatprep.subr.mxu0 0.0
    %995 = vmatpush1.msra.mxu0 %v225
    %996 = vmatprep.subr.mxu0 0.0
    %997 = vmatpush1.msra.mxu0 0.0
    %998 = vmatprep.subr.mxu0 0.0
    %999 = vmatpush1.msra.mxu0 0.0
    %1000 = vmatprep.subr.mxu0 0.0
    %1001 = vmatpush1.msra.mxu0 0.0
    %1002 = vmatprep.subr.mxu0 0.0
    %1003 = vmatpush1.msra.mxu0 0.0
    %1004 = vmatprep.subr.mxu0 0.0
    %1005 = vmatpush1.msra.mxu0 0.0
    %1006 = vmatprep.subr.mxu0 0.0
    %1007 = vmatpush1.msra.mxu0 0.0
    %1008 = vmatprep.subr.mxu0 0.0
    %1009 = vmatpush1.msra.mxu0 0.0
    %1010 = vmatprep.subr.mxu0 0.0
    %1011 = vmatpush1.msra.mxu0 0.0
    %1012 = vmatprep.subr.mxu0 0.0
    %1013 = vmatpush1.msra.mxu0 0.0
    %1014 = vmatprep.subr.mxu0 0.0
    %1015 = vmatpush1.msra.mxu0 0.0
    %1016 = vmatprep.subr.mxu0 0.0
    %1017 = vmatpush1.msra.mxu0 0.0
    %1018 = vmatprep.subr.mxu0 0.0
    %1019 = vmatpush1.msra.mxu0 0.0
    %1020 = vmatprep.subr.mxu0 0.0
    %1021 = vmatpush1.msra.mxu0 0.0
    %1022 = vmatprep.subr.mxu0 0.0
    %1023 = vmatpush1.msra.mxu0 0.0
    %1024 = vmatprep.subr.mxu0 0.0
    %1025 = vmatpush1.msra.mxu0 0.0
    %1026 = vmatprep.subr.mxu0 0.0
    %1027 = vmatpush1.msra.mxu0 0.0
    %1028 = vmatprep.mubr.f32.mxu0 0.0
    %1029 = vmatmul.mubr.f32.gmra.mrb[0].mxu0 %v261
    %v1030 = vpop.f32.mrb[0].mxu0
    %v1031 = vadd.f32 %v886, %v1030
    %v1032 = vpop.f32.mrb[0].mxu0
    %1033 = vmatprep.mubr.f32.mxu0 0.0
    %1034 = vmatmul.mubr.f32.gmra.mrb[0].mxu0 %v262
    %v1035 = vpop.f32.mrb[0].mxu0
    %v1036 = vadd.f32 %v886, %v1035
    %v1037 = vpop.f32.mrb[0].mxu0
    %1038 = vdwg.mxu0
    %v1039 = vadd.f32 %v854, %v954
    %v1040 = vadd.f32 %v857, %v960
    %v1041 = vxor.u32 %v1039, 2147483648
    %v1042 = vxor.u32 %v1040, 2147483648
    %v1043 = vmul.f32 %v1041, 1.442695
    %v1044 = vpow.pop %v1043
    %v1045 = vmul.f32 %v1042, 1.442695
    %v1046 = vpow.pop %v1045
    %v1047 = vadd.f32 %v1044, 1.0
    %v1048 = vadd.f32 %v1046, 1.0
    %v1049 = vrcp.pop %v1047
    %v1050 = vmul.f32 1.0, %v1049
    %v1051 = vrcp.pop %v1048
    %v1052 = vmul.f32 1.0, %v1051
    %v1053 = vadd.f32 %v855, %v956
    %v1054 = vadd.f32 %v858, %v962
    %v1055 = vxor.u32 %v1053, 2147483648
    %v1056 = vxor.u32 %v1054, 2147483648
    %v1057 = vmul.f32 %v1055, 1.442695
    %v1058 = vpow.pop %v1057
    %v1059 = vmul.f32 %v1056, 1.442695
    %v1060 = vpow.pop %v1059
    %v1061 = vadd.f32 %v1058, 1.0
    %v1062 = vadd.f32 %v1060, 1.0
    %v1063 = vrcp.pop %v1061
    %v1064 = vmul.f32 1.0, %v1063
    %v1065 = vrcp.pop %v1062
    %v1066 = vmul.f32 1.0, %v1065
    %v1067 = vmul.f32 %v1050, %v1031
    %v1068 = vmul.f32 %v1052, %v1036
    %v1069 = vadd.f32 %v856, %v1067
    %v1070 = vadd.f32 %v859, %v1068
    %v1071 = vtanh.pop %v1069
    %v1072 = vtanh.pop %v1070
    %v1073 = vsub.f32 %v261, %v1071
    %v1074 = vsub.f32 %v262, %v1072
    %v1075 = vmul.f32 %v1064, %v1073
    %v1076 = vmul.f32 %v1066, %v1074
    %v1077 = vadd.f32 %v1071, %v1075
    %v1078 = vadd.f32 %v1072, %v1076
    %1079 = vmatprep.subr.mxu0 %v228
    %1080 = vmatpush1.msra.mxu0 %v227
    %1081 = vmatprep.subr.mxu0 %v230
    %1082 = vmatpush1.msra.mxu0 %v229
    %1083 = vmatprep.subr.mxu0 %v232
    %1084 = vmatpush1.msra.mxu0 %v231
    %1085 = vmatprep.subr.mxu0 %v234
    %1086 = vmatpush1.msra.mxu0 %v233
    %1087 = vmatprep.subr.mxu0 %v236
    %1088 = vmatpush1.msra.mxu0 %v235
    %1089 = vmatprep.subr.mxu0 %v238
    %1090 = vmatpush1.msra.mxu0 %v237
    %1091 = vmatprep.subr.mxu0 %v240
    %1092 = vmatpush1.msra.mxu0 %v239
    %1093 = vmatprep.subr.mxu0 %v242
    %1094 = vmatpush1.msra.mxu0 %v241
    %1095 = vmatprep.subr.mxu0 %v244
    %1096 = vmatpush1.msra.mxu0 %v243
    %1097 = vmatprep.subr.mxu0 %v246
    %1098 = vmatpush1.msra.mxu0 %v245
    %1099 = vmatprep.subr.mxu0 %v248
    %1100 = vmatpush1.msra.mxu0 %v247
    %1101 = vmatprep.subr.mxu0 %v250
    %1102 = vmatpush1.msra.mxu0 %v249
    %1103 = vmatprep.subr.mxu0 %v252
    %1104 = vmatpush1.msra.mxu0 %v251
    %1105 = vmatprep.subr.mxu0 %v254
    %1106 = vmatpush1.msra.mxu0 %v253
    %1107 = vmatprep.subr.mxu0 %v256
    %1108 = vmatpush1.msra.mxu0 %v255
    %1109 = vmatprep.subr.mxu0 %v258
    %1110 = vmatpush1.msra.mxu0 %v257
    %1111 = vmatprep.subr.mxu0 0.0
    %1112 = vmatpush1.msra.mxu0 0.0
    %1113 = vmatprep.subr.mxu0 0.0
    %1114 = vmatpush1.msra.mxu0 0.0
    %1115 = vmatprep.subr.mxu0 0.0
    %1116 = vmatpush1.msra.mxu0 0.0
    %1117 = vmatprep.subr.mxu0 0.0
    %1118 = vmatpush1.msra.mxu0 0.0
    %1119 = vmatprep.subr.mxu0 0.0
    %1120 = vmatpush1.msra.mxu0 0.0
    %1121 = vmatprep.subr.mxu0 0.0
    %1122 = vmatpush1.msra.mxu0 0.0
    %1123 = vmatprep.subr.mxu0 0.0
    %1124 = vmatpush1.msra.mxu0 0.0
    %1125 = vmatprep.subr.mxu0 0.0
    %1126 = vmatpush1.msra.mxu0 0.0
    %1127 = vmatprep.subr.mxu0 0.0
    %1128 = vmatpush1.msra.mxu0 0.0
    %1129 = vmatprep.subr.mxu0 0.0
    %1130 = vmatpush1.msra.mxu0 0.0
    %1131 = vmatprep.subr.mxu0 0.0
    %1132 = vmatpush1.msra.mxu0 0.0
    %1133 = vmatprep.subr.mxu0 0.0
    %1134 = vmatpush1.msra.mxu0 0.0
    %1135 = vmatprep.subr.mxu0 0.0
    %1136 = vmatpush1.msra.mxu0 0.0
    %1137 = vmatprep.subr.mxu0 0.0
    %1138 = vmatpush1.msra.mxu0 0.0
    %1139 = vmatprep.subr.mxu0 0.0
    %1140 = vmatpush1.msra.mxu0 0.0
    %1141 = vmatprep.subr.mxu0 0.0
    %1142 = vmatpush1.msra.mxu0 0.0
    %1143 = vmatprep.mubr.f32.mxu0 0.0
    %1144 = vmatmul.mubr.f32.gmra.mrb[0].mxu0 %v1077
    %v1145 = vpop.f32.mrb[0].mxu0
    %v1146 = vadd.f32 %v277, %v1145
    %v1147 = vpop.f32.mrb[0].mxu0
    %v1148 = vadd.f32 %v281, %v1147
    %1149 = vmatprep.mubr.f32.mxu0 0.0
    %1150 = vmatmul.mubr.f32.gmra.mrb[0].mxu0 %v1078
    %v1151 = vpop.f32.mrb[0].mxu0
    %v1152 = vadd.f32 %v277, %v1151
    %v1153 = vpop.f32.mrb[0].mxu0
    %v1154 = vadd.f32 %v281, %v1153
    %1155 = vdwg.mxu0
    %1156 = vmatprep.subr.mxu0 0.0
    %1157 = vmatpush1.msra.mxu0 %v1146
    %1158 = vmatprep.subr.mxu0 0.0
    %1159 = vmatpush1.msra.mxu0 %v1152
    %1160 = vmatprep.subr.mxu0 0.0
    %1161 = vmatpush1.msra.mxu0 0.0
    %1162 = vmatprep.subr.mxu0 0.0
    %1163 = vmatpush1.msra.mxu0 0.0
    %1164 = vmatprep.subr.mxu0 0.0
    %1165 = vmatpush1.msra.mxu0 0.0
    %1166 = vmatprep.subr.mxu0 0.0
    %1167 = vmatpush1.msra.mxu0 0.0
    %1168 = vmatprep.subr.mxu0 0.0
    %1169 = vmatpush1.msra.mxu0 0.0
    %1170 = vmatprep.subr.mxu0 0.0
    %1171 = vmatpush1.msra.mxu0 0.0
    %1172 = vmatprep.subr.mxu0 0.0
    %1173 = vmatpush1.msra.mxu0 0.0
    %1174 = vmatprep.subr.mxu0 0.0
    %1175 = vmatpush1.msra.mxu0 0.0
    %1176 = vmatprep.subr.mxu0 0.0
    %1177 = vmatpush1.msra.mxu0 0.0
    %1178 = vmatprep.subr.mxu0 0.0
    %1179 = vmatpush1.msra.mxu0 0.0
    %1180 = vmatprep.subr.mxu0 0.0
    %1181 = vmatpush1.msra.mxu0 0.0
    %1182 = vmatprep.subr.mxu0 0.0
    %1183 = vmatpush1.msra.mxu0 0.0
    %1184 = vmatprep.subr.mxu0 0.0
    %1185 = vmatpush1.msra.mxu0 0.0
    %1186 = vmatprep.subr.mxu0 0.0
    %1187 = vmatpush1.msra.mxu0 0.0
    %1188 = vmatprep.subr.mxu0 0.0
    %1189 = vmatpush1.msra.mxu0 0.0
    %1190 = vmatprep.subr.mxu0 0.0
    %1191 = vmatpush1.msra.mxu0 0.0
    %1192 = vmatprep.subr.mxu0 0.0
    %1193 = vmatpush1.msra.mxu0 0.0
    %1194 = vmatprep.subr.mxu0 0.0
    %1195 = vmatpush1.msra.mxu0 0.0
    %1196 = vmatprep.subr.mxu0 0.0
    %1197 = vmatpush1.msra.mxu0 0.0
    %1198 = vmatprep.subr.mxu0 0.0
    %1199 = vmatpush1.msra.mxu0 0.0
    %1200 = vmatprep.subr.mxu0 0.0
    %1201 = vmatpush1.msra.mxu0 0.0
    %1202 = vmatprep.subr.mxu0 0.0
    %1203 = vmatpush1.msra.mxu0 0.0
    %1204 = vmatprep.subr.mxu0 0.0
    %1205 = vmatpush1.msra.mxu0 0.0
    %1206 = vmatprep.subr.mxu0 0.0
    %1207 = vmatpush1.msra.mxu0 0.0
    %1208 = vmatprep.subr.mxu0 0.0
    %1209 = vmatpush1.msra.mxu0 0.0
    %1210 = vmatprep.subr.mxu0 0.0
    %1211 = vmatpush1.msra.mxu0 0.0
    %1212 = vmatprep.subr.mxu0 0.0
    %1213 = vmatpush1.msra.mxu0 0.0
    %1214 = vmatprep.subr.mxu0 0.0
    %1215 = vmatpush1.msra.mxu0 0.0
    %1216 = vmatprep.subr.mxu0 0.0
    %1217 = vmatpush1.msra.mxu0 0.0
    %1218 = vmatprep.subr.mxu0 0.0
    %1219 = vmatpush1.msra.mxu0 0.0
    %1220 = vmatprep.mubr.f32.mxu0 0.0
    %1221 = vmatmul.mubr.f32.gmra.mrb[0].mxu0 %v361
    %v1222 = vpop.f32.mrb[0].mxu0
    %v1223 = vadd.f32 0.0, %v1222
    %v1224 = vpop.f32.mrb[0].mxu0
    %1225 = vmatprep.mubr.f32.mxu0 0.0
    %1226 = vmatmul.mubr.f32.gmra.mrb[0].mxu0 %v364
    %v1227 = vpop.f32.mrb[0].mxu0
    %v1228 = vadd.f32 0.0, %v1227
    %v1229 = vpop.f32.mrb[0].mxu0
    %1230 = vdwg.mxu0
    %1231 = vmatprep.subr.mxu0 0.0
    %1232 = vmatpush1.msra.mxu0 %v1148
    %1233 = vmatprep.subr.mxu0 0.0
    %1234 = vmatpush1.msra.mxu0 %v1154
    %1235 = vmatprep.subr.mxu0 0.0
    %1236 = vmatpush1.msra.mxu0 0.0
    %1237 = vmatprep.subr.mxu0 0.0
    %1238 = vmatpush1.msra.mxu0 0.0
    %1239 = vmatprep.subr.mxu0 0.0
    %1240 = vmatpush1.msra.mxu0 0.0
    %1241 = vmatprep.subr.mxu0 0.0
    %1242 = vmatpush1.msra.mxu0 0.0
    %1243 = vmatprep.subr.mxu0 0.0
    %1244 = vmatpush1.msra.mxu0 0.0
    %1245 = vmatprep.subr.mxu0 0.0
    %1246 = vmatpush1.msra.mxu0 0.0
    %1247 = vmatprep.subr.mxu0 0.0
    %1248 = vmatpush1.msra.mxu0 0.0
    %1249 = vmatprep.subr.mxu0 0.0
    %1250 = vmatpush1.msra.mxu0 0.0
    %1251 = vmatprep.subr.mxu0 0.0
    %1252 = vmatpush1.msra.mxu0 0.0
    %1253 = vmatprep.subr.mxu0 0.0
    %1254 = vmatpush1.msra.mxu0 0.0
    %1255 = vmatprep.subr.mxu0 0.0
    %1256 = vmatpush1.msra.mxu0 0.0
    %1257 = vmatprep.subr.mxu0 0.0
    %1258 = vmatpush1.msra.mxu0 0.0
    %1259 = vmatprep.subr.mxu0 0.0
    %1260 = vmatpush1.msra.mxu0 0.0
    %1261 = vmatprep.subr.mxu0 0.0
    %1262 = vmatpush1.msra.mxu0 0.0
    %1263 = vmatprep.subr.mxu0 0.0
    %1264 = vmatpush1.msra.mxu0 0.0
    %1265 = vmatprep.subr.mxu0 0.0
    %1266 = vmatpush1.msra.mxu0 0.0
    %1267 = vmatprep.subr.mxu0 0.0
    %1268 = vmatpush1.msra.mxu0 0.0
    %1269 = vmatprep.subr.mxu0 0.0
    %1270 = vmatpush1.msra.mxu0 0.0
    %1271 = vmatprep.subr.mxu0 0.0
    %1272 = vmatpush1.msra.mxu0 0.0
    %1273 = vmatprep.subr.mxu0 0.0
    %1274 = vmatpush1.msra.mxu0 0.0
    %1275 = vmatprep.subr.mxu0 0.0
    %1276 = vmatpush1.msra.mxu0 0.0
    %1277 = vmatprep.subr.mxu0 0.0
    %1278 = vmatpush1.msra.mxu0 0.0
    %1279 = vmatprep.subr.mxu0 0.0
    %1280 = vmatpush1.msra.mxu0 0.0
    %1281 = vmatprep.subr.mxu0 0.0
    %1282 = vmatpush1.msra.mxu0 0.0
    %1283 = vmatprep.subr.mxu0 0.0
    %1284 = vmatpush1.msra.mxu0 0.0
    %1285 = vmatprep.subr.mxu0 0.0
    %1286 = vmatpush1.msra.mxu0 0.0
    %1287 = vmatprep.subr.mxu0 0.0
    %1288 = vmatpush1.msra.mxu0 0.0
    %1289 = vmatprep.subr.mxu0 0.0
    %1290 = vmatpush1.msra.mxu0 0.0
    %1291 = vmatprep.subr.mxu0 0.0
    %1292 = vmatpush1.msra.mxu0 0.0
    %1293 = vmatprep.subr.mxu0 0.0
    %1294 = vmatpush1.msra.mxu0 0.0
    %1295 = vmatprep.mubr.f32.mxu0 0.0
    %1296 = vmatmul.mubr.f32.gmra.mrb[0].mxu0 %v442
    %v1297 = vpop.f32.mrb[0].mxu0
    %v1298 = vadd.f32 0.0, %v1297
    %v1299 = vpop.f32.mrb[0].mxu0
    %1300 = vmatprep.mubr.f32.mxu0 0.0
    %1301 = vmatmul.mubr.f32.gmra.mrb[0].mxu0 %v445
    %v1302 = vpop.f32.mrb[0].mxu0
    %v1303 = vadd.f32 0.0, %v1302
    %v1304 = vpop.f32.mrb[0].mxu0
    %1305 = vdwg.mxu0
    %1306 = vmatprep.subr.mxu0 %v130
    %1307 = vmatpush1.msra.mxu0 %v129
    %1308 = vmatprep.subr.mxu0 %v133
    %1309 = vmatpush1.msra.mxu0 %v132
    %1310 = vmatprep.subr.mxu0 %v136
    %1311 = vmatpush1.msra.mxu0 %v135
    %1312 = vmatprep.subr.mxu0 %v139
    %1313 = vmatpush1.msra.mxu0 %v138
    %1314 = vmatprep.subr.mxu0 %v142
    %1315 = vmatpush1.msra.mxu0 %v141
    %1316 = vmatprep.subr.mxu0 %v145
    %1317 = vmatpush1.msra.mxu0 %v144
    %1318 = vmatprep.subr.mxu0 %v148
    %1319 = vmatpush1.msra.mxu0 %v147
    %1320 = vmatprep.subr.mxu0 %v151
    %1321 = vmatpush1.msra.mxu0 %v150
    %1322 = vmatprep.subr.mxu0 %v154
    %1323 = vmatpush1.msra.mxu0 %v153
    %1324 = vmatprep.subr.mxu0 %v157
    %1325 = vmatpush1.msra.mxu0 %v156
    %1326 = vmatprep.subr.mxu0 %v160
    %1327 = vmatpush1.msra.mxu0 %v159
    %1328 = vmatprep.subr.mxu0 %v163
    %1329 = vmatpush1.msra.mxu0 %v162
    %1330 = vmatprep.subr.mxu0 %v166
    %1331 = vmatpush1.msra.mxu0 %v165
    %1332 = vmatprep.subr.mxu0 %v169
    %1333 = vmatpush1.msra.mxu0 %v168
    %1334 = vmatprep.subr.mxu0 %v172
    %1335 = vmatpush1.msra.mxu0 %v171
    %1336 = vmatprep.subr.mxu0 %v175
    %1337 = vmatpush1.msra.mxu0 %v174
    %1338 = vmatprep.subr.mxu0 0.0
    %1339 = vmatpush1.msra.mxu0 0.0
    %1340 = vmatprep.subr.mxu0 0.0
    %1341 = vmatpush1.msra.mxu0 0.0
    %1342 = vmatprep.subr.mxu0 0.0
    %1343 = vmatpush1.msra.mxu0 0.0
    %1344 = vmatprep.subr.mxu0 0.0
    %1345 = vmatpush1.msra.mxu0 0.0
    %1346 = vmatprep.subr.mxu0 0.0
    %1347 = vmatpush1.msra.mxu0 0.0
    %1348 = vmatprep.subr.mxu0 0.0
    %1349 = vmatpush1.msra.mxu0 0.0
    %1350 = vmatprep.subr.mxu0 0.0
    %1351 = vmatpush1.msra.mxu0 0.0
    %1352 = vmatprep.subr.mxu0 0.0
    %1353 = vmatpush1.msra.mxu0 0.0
    %1354 = vmatprep.subr.mxu0 0.0
    %1355 = vmatpush1.msra.mxu0 0.0
    %1356 = vmatprep.subr.mxu0 0.0
    %1357 = vmatpush1.msra.mxu0 0.0
    %1358 = vmatprep.subr.mxu0 0.0
    %1359 = vmatpush1.msra.mxu0 0.0
    %1360 = vmatprep.subr.mxu0 0.0
    %1361 = vmatpush1.msra.mxu0 0.0
    %1362 = vmatprep.subr.mxu0 0.0
    %1363 = vmatpush1.msra.mxu0 0.0
    %1364 = vmatprep.subr.mxu0 0.0
    %1365 = vmatpush1.msra.mxu0 0.0
    %1366 = vmatprep.subr.mxu0 0.0
    %1367 = vmatpush1.msra.mxu0 0.0
    %1368 = vmatprep.subr.mxu0 0.0
    %1369 = vmatpush1.msra.mxu0 0.0
    %1370 = vmatprep.mubr.f32.mxu0 0.0
    %1371 = vmatmul.mubr.f32.gmra.mrb[0].mxu0 %v1298
    %v1372 = vpop.f32.mrb[0].mxu0
    %v1373 = vadd.f32 0.0, %v1372
    %v1374 = vpop.f32.mrb[0].mxu0
    %v1375 = vadd.f32 0.0, %v1374
    %1376 = vmatprep.mubr.f32.mxu0 0.0
    %1377 = vmatmul.mubr.f32.gmra.mrb[0].mxu0 %v1303
    %v1378 = vpop.f32.mrb[0].mxu0
    %v1379 = vadd.f32 0.0, %v1378
    %v1380 = vpop.f32.mrb[0].mxu0
    %v1381 = vadd.f32 0.0, %v1380
    %1382 = vdwg.mxu0
    %1383 = vmatprep.subr.mxu0 0.0
    %1384 = vmatpush1.msra.mxu0 %v131
    %1385 = vmatprep.subr.mxu0 0.0
    %1386 = vmatpush1.msra.mxu0 %v134
    %1387 = vmatprep.subr.mxu0 0.0
    %1388 = vmatpush1.msra.mxu0 %v137
    %1389 = vmatprep.subr.mxu0 0.0
    %1390 = vmatpush1.msra.mxu0 %v140
    %1391 = vmatprep.subr.mxu0 0.0
    %1392 = vmatpush1.msra.mxu0 %v143
    %1393 = vmatprep.subr.mxu0 0.0
    %1394 = vmatpush1.msra.mxu0 %v146
    %1395 = vmatprep.subr.mxu0 0.0
    %1396 = vmatpush1.msra.mxu0 %v149
    %1397 = vmatprep.subr.mxu0 0.0
    %1398 = vmatpush1.msra.mxu0 %v152
    %1399 = vmatprep.subr.mxu0 0.0
    %1400 = vmatpush1.msra.mxu0 %v155
    %1401 = vmatprep.subr.mxu0 0.0
    %1402 = vmatpush1.msra.mxu0 %v158
    %1403 = vmatprep.subr.mxu0 0.0
    %1404 = vmatpush1.msra.mxu0 %v161
    %1405 = vmatprep.subr.mxu0 0.0
    %1406 = vmatpush1.msra.mxu0 %v164
    %1407 = vmatprep.subr.mxu0 0.0
    %1408 = vmatpush1.msra.mxu0 %v167
    %1409 = vmatprep.subr.mxu0 0.0
    %1410 = vmatpush1.msra.mxu0 %v170
    %1411 = vmatprep.subr.mxu0 0.0
    %1412 = vmatpush1.msra.mxu0 %v173
    %1413 = vmatprep.subr.mxu0 0.0
    %1414 = vmatpush1.msra.mxu0 %v176
    %1415 = vmatprep.subr.mxu0 0.0
    %1416 = vmatpush1.msra.mxu0 0.0
    %1417 = vmatprep.subr.mxu0 0.0
    %1418 = vmatpush1.msra.mxu0 0.0
    %1419 = vmatprep.subr.mxu0 0.0
    %1420 = vmatpush1.msra.mxu0 0.0
    %1421 = vmatprep.subr.mxu0 0.0
    %1422 = vmatpush1.msra.mxu0 0.0
    %1423 = vmatprep.subr.mxu0 0.0
    %1424 = vmatpush1.msra.mxu0 0.0
    %1425 = vmatprep.subr.mxu0 0.0
    %1426 = vmatpush1.msra.mxu0 0.0
    %1427 = vmatprep.subr.mxu0 0.0
    %1428 = vmatpush1.msra.mxu0 0.0
    %1429 = vmatprep.subr.mxu0 0.0
    %1430 = vmatpush1.msra.mxu0 0.0
    %1431 = vmatprep.subr.mxu0 0.0
    %1432 = vmatpush1.msra.mxu0 0.0
    %1433 = vmatprep.subr.mxu0 0.0
    %1434 = vmatpush1.msra.mxu0 0.0
    %1435 = vmatprep.subr.mxu0 0.0
    %1436 = vmatpush1.msra.mxu0 0.0
    %1437 = vmatprep.subr.mxu0 0.0
    %1438 = vmatpush1.msra.mxu0 0.0
    %1439 = vmatprep.subr.mxu0 0.0
    %1440 = vmatpush1.msra.mxu0 0.0
    %1441 = vmatprep.subr.mxu0 0.0
    %1442 = vmatpush1.msra.mxu0 0.0
    %1443 = vmatprep.subr.mxu0 0.0
    %1444 = vmatpush1.msra.mxu0 0.0
    %1445 = vmatprep.subr.mxu0 0.0
    %1446 = vmatpush1.msra.mxu0 0.0
    %1447 = vmatprep.mubr.f32.mxu0 0.0
    %1448 = vmatmul.mubr.f32.gmra.mrb[0].mxu0 %v1298
    %v1449 = vpop.f32.mrb[0].mxu0
    %v1450 = vadd.f32 0.0, %v1449
    %v1451 = vpop.f32.mrb[0].mxu0
    %1452 = vmatprep.mubr.f32.mxu0 0.0
    %1453 = vmatmul.mubr.f32.gmra.mrb[0].mxu0 %v1303
    %v1454 = vpop.f32.mrb[0].mxu0
    %v1455 = vadd.f32 0.0, %v1454
    %v1456 = vpop.f32.mrb[0].mxu0
    %1457 = vdwg.mxu0
    %1458 = vmatprep.subr.mxu0 %v81
    %1459 = vmatpush1.msra.mxu0 %v80
    %1460 = vmatprep.subr.mxu0 %v84
    %1461 = vmatpush1.msra.mxu0 %v83
    %1462 = vmatprep.subr.mxu0 %v87
    %1463 = vmatpush1.msra.mxu0 %v86
    %1464 = vmatprep.subr.mxu0 %v90
    %1465 = vmatpush1.msra.mxu0 %v89
    %1466 = vmatprep.subr.mxu0 %v93
    %1467 = vmatpush1.msra.mxu0 %v92
    %1468 = vmatprep.subr.mxu0 %v96
    %1469 = vmatpush1.msra.mxu0 %v95
    %1470 = vmatprep.subr.mxu0 %v99
    %1471 = vmatpush1.msra.mxu0 %v98
    %1472 = vmatprep.subr.mxu0 %v102
    %1473 = vmatpush1.msra.mxu0 %v101
    %1474 = vmatprep.subr.mxu0 %v105
    %1475 = vmatpush1.msra.mxu0 %v104
    %1476 = vmatprep.subr.mxu0 %v108
    %1477 = vmatpush1.msra.mxu0 %v107
    %1478 = vmatprep.subr.mxu0 %v111
    %1479 = vmatpush1.msra.mxu0 %v110
    %1480 = vmatprep.subr.mxu0 %v114
    %1481 = vmatpush1.msra.mxu0 %v113
    %1482 = vmatprep.subr.mxu0 %v117
    %1483 = vmatpush1.msra.mxu0 %v116
    %1484 = vmatprep.subr.mxu0 %v120
    %1485 = vmatpush1.msra.mxu0 %v119
    %1486 = vmatprep.subr.mxu0 %v123
    %1487 = vmatpush1.msra.mxu0 %v122
    %1488 = vmatprep.subr.mxu0 %v126
    %1489 = vmatpush1.msra.mxu0 %v125
    %1490 = vmatprep.subr.mxu0 0.0
    %1491 = vmatpush1.msra.mxu0 0.0
    %1492 = vmatprep.subr.mxu0 0.0
    %1493 = vmatpush1.msra.mxu0 0.0
    %1494 = vmatprep.subr.mxu0 0.0
    %1495 = vmatpush1.msra.mxu0 0.0
    %1496 = vmatprep.subr.mxu0 0.0
    %1497 = vmatpush1.msra.mxu0 0.0
    %1498 = vmatprep.subr.mxu0 0.0
    %1499 = vmatpush1.msra.mxu0 0.0
    %1500 = vmatprep.subr.mxu0 0.0
    %1501 = vmatpush1.msra.mxu0 0.0
    %1502 = vmatprep.subr.mxu0 0.0
    %1503 = vmatpush1.msra.mxu0 0.0
    %1504 = vmatprep.subr.mxu0 0.0
    %1505 = vmatpush1.msra.mxu0 0.0
    %1506 = vmatprep.subr.mxu0 0.0
    %1507 = vmatpush1.msra.mxu0 0.0
    %1508 = vmatprep.subr.mxu0 0.0
    %1509 = vmatpush1.msra.mxu0 0.0
    %1510 = vmatprep.subr.mxu0 0.0
    %1511 = vmatpush1.msra.mxu0 0.0
    %1512 = vmatprep.subr.mxu0 0.0
    %1513 = vmatpush1.msra.mxu0 0.0
    %1514 = vmatprep.subr.mxu0 0.0
    %1515 = vmatpush1.msra.mxu0 0.0
    %1516 = vmatprep.subr.mxu0 0.0
    %1517 = vmatpush1.msra.mxu0 0.0
    %1518 = vmatprep.subr.mxu0 0.0
    %1519 = vmatpush1.msra.mxu0 0.0
    %1520 = vmatprep.subr.mxu0 0.0
    %1521 = vmatpush1.msra.mxu0 0.0
    %1522 = vmatprep.mubr.f32.mxu0 0.0
    %1523 = vmatmul.mubr.f32.gmra.mrb[0].mxu0 %v1223
    %v1524 = vpop.f32.mrb[0].mxu0
    %v1525 = vadd.f32 %v1373, %v1524
    %v1526 = vpop.f32.mrb[0].mxu0
    %v1527 = vadd.f32 %v1375, %v1526
    %1528 = vmatprep.mubr.f32.mxu0 0.0
    %1529 = vmatmul.mubr.f32.gmra.mrb[0].mxu0 %v1228
    %v1530 = vpop.f32.mrb[0].mxu0
    %v1531 = vadd.f32 %v1379, %v1530
    %v1532 = vpop.f32.mrb[0].mxu0
    %v1533 = vadd.f32 %v1381, %v1532
    %1534 = vdwg.mxu0
    %1535 = vmatprep.subr.mxu0 0.0
    %1536 = vmatpush1.msra.mxu0 %v82
    %1537 = vmatprep.subr.mxu0 0.0
    %1538 = vmatpush1.msra.mxu0 %v85
    %1539 = vmatprep.subr.mxu0 0.0
    %1540 = vmatpush1.msra.mxu0 %v88
    %1541 = vmatprep.subr.mxu0 0.0
    %1542 = vmatpush1.msra.mxu0 %v91
    %1543 = vmatprep.subr.mxu0 0.0
    %1544 = vmatpush1.msra.mxu0 %v94
    %1545 = vmatprep.subr.mxu0 0.0
    %1546 = vmatpush1.msra.mxu0 %v97
    %1547 = vmatprep.subr.mxu0 0.0
    %1548 = vmatpush1.msra.mxu0 %v100
    %1549 = vmatprep.subr.mxu0 0.0
    %1550 = vmatpush1.msra.mxu0 %v103
    %1551 = vmatprep.subr.mxu0 0.0
    %1552 = vmatpush1.msra.mxu0 %v106
    %1553 = vmatprep.subr.mxu0 0.0
    %1554 = vmatpush1.msra.mxu0 %v109
    %1555 = vmatprep.subr.mxu0 0.0
    %1556 = vmatpush1.msra.mxu0 %v112
    %1557 = vmatprep.subr.mxu0 0.0
    %1558 = vmatpush1.msra.mxu0 %v115
    %1559 = vmatprep.subr.mxu0 0.0
    %1560 = vmatpush1.msra.mxu0 %v118
    %1561 = vmatprep.subr.mxu0 0.0
    %1562 = vmatpush1.msra.mxu0 %v121
    %1563 = vmatprep.subr.mxu0 0.0
    %1564 = vmatpush1.msra.mxu0 %v124
    %1565 = vmatprep.subr.mxu0 0.0
    %1566 = vmatpush1.msra.mxu0 %v127
    %1567 = vmatprep.subr.mxu0 0.0
    %1568 = vmatpush1.msra.mxu0 0.0
    %1569 = vmatprep.subr.mxu0 0.0
    %1570 = vmatpush1.msra.mxu0 0.0
    %1571 = vmatprep.subr.mxu0 0.0
    %1572 = vmatpush1.msra.mxu0 0.0
    %1573 = vmatprep.subr.mxu0 0.0
    %1574 = vmatpush1.msra.mxu0 0.0
    %1575 = vmatprep.subr.mxu0 0.0
    %1576 = vmatpush1.msra.mxu0 0.0
    %1577 = vmatprep.subr.mxu0 0.0
    %1578 = vmatpush1.msra.mxu0 0.0
    %1579 = vmatprep.subr.mxu0 0.0
    %1580 = vmatpush1.msra.mxu0 0.0
    %1581 = vmatprep.subr.mxu0 0.0
    %1582 = vmatpush1.msra.mxu0 0.0
    %1583 = vmatprep.subr.mxu0 0.0
    %1584 = vmatpush1.msra.mxu0 0.0
    %1585 = vmatprep.subr.mxu0 0.0
    %1586 = vmatpush1.msra.mxu0 0.0
    %1587 = vmatprep.subr.mxu0 0.0
    %1588 = vmatpush1.msra.mxu0 0.0
    %1589 = vmatprep.subr.mxu0 0.0
    %1590 = vmatpush1.msra.mxu0 0.0
    %1591 = vmatprep.subr.mxu0 0.0
    %1592 = vmatpush1.msra.mxu0 0.0
    %1593 = vmatprep.subr.mxu0 0.0
    %1594 = vmatpush1.msra.mxu0 0.0
    %1595 = vmatprep.subr.mxu0 0.0
    %1596 = vmatpush1.msra.mxu0 0.0
    %1597 = vmatprep.subr.mxu0 0.0
    %1598 = vmatpush1.msra.mxu0 0.0
    %1599 = vmatprep.mubr.f32.mxu0 0.0
    %1600 = vmatmul.mubr.f32.gmra.mrb[0].mxu0 %v1223
    %v1601 = vpop.f32.mrb[0].mxu0
    %v1602 = vadd.f32 %v1450, %v1601
    %v1603 = vpop.f32.mrb[0].mxu0
    %1604 = vmatprep.mubr.f32.mxu0 0.0
    %1605 = vmatmul.mubr.f32.gmra.mrb[0].mxu0 %v1228
    %v1606 = vpop.f32.mrb[0].mxu0
    %v1607 = vadd.f32 %v1455, %v1606
    %v1608 = vpop.f32.mrb[0].mxu0
    %1609 = vdwg.mxu0
    %v1610 = vadd.f32 %v1525, %v845
    %v1611 = vadd.f32 %v1527, %v849
    %v1612 = vadd.f32 %v1602, %v853
    %v1613 = vadd.f32 %v1531, %v845
    %v1614 = vadd.f32 %v1533, %v849
    %v1615 = vadd.f32 %v1607, %v853
    %1616 = vmatprep.subr.mxu0 %v179
    %1617 = vmatpush1.msra.mxu0 %v178
    %1618 = vmatprep.subr.mxu0 %v182
    %1619 = vmatpush1.msra.mxu0 %v181
    %1620 = vmatprep.subr.mxu0 %v185
    %1621 = vmatpush1.msra.mxu0 %v184
    %1622 = vmatprep.subr.mxu0 %v188
    %1623 = vmatpush1.msra.mxu0 %v187
    %1624 = vmatprep.subr.mxu0 %v191
    %1625 = vmatpush1.msra.mxu0 %v190
    %1626 = vmatprep.subr.mxu0 %v194
    %1627 = vmatpush1.msra.mxu0 %v193
    %1628 = vmatprep.subr.mxu0 %v197
    %1629 = vmatpush1.msra.mxu0 %v196
    %1630 = vmatprep.subr.mxu0 %v200
    %1631 = vmatpush1.msra.mxu0 %v199
    %1632 = vmatprep.subr.mxu0 %v203
    %1633 = vmatpush1.msra.mxu0 %v202
    %1634 = vmatprep.subr.mxu0 %v206
    %1635 = vmatpush1.msra.mxu0 %v205
    %1636 = vmatprep.subr.mxu0 %v209
    %1637 = vmatpush1.msra.mxu0 %v208
    %1638 = vmatprep.subr.mxu0 %v212
    %1639 = vmatpush1.msra.mxu0 %v211
    %1640 = vmatprep.subr.mxu0 %v215
    %1641 = vmatpush1.msra.mxu0 %v214
    %1642 = vmatprep.subr.mxu0 %v218
    %1643 = vmatpush1.msra.mxu0 %v217
    %1644 = vmatprep.subr.mxu0 %v221
    %1645 = vmatpush1.msra.mxu0 %v220
    %1646 = vmatprep.subr.mxu0 %v224
    %1647 = vmatpush1.msra.mxu0 %v223
    %1648 = vmatprep.subr.mxu0 0.0
    %1649 = vmatpush1.msra.mxu0 0.0
    %1650 = vmatprep.subr.mxu0 0.0
    %1651 = vmatpush1.msra.mxu0 0.0
    %1652 = vmatprep.subr.mxu0 0.0
    %1653 = vmatpush1.msra.mxu0 0.0
    %1654 = vmatprep.subr.mxu0 0.0
    %1655 = vmatpush1.msra.mxu0 0.0
    %1656 = vmatprep.subr.mxu0 0.0
    %1657 = vmatpush1.msra.mxu0 0.0
    %1658 = vmatprep.subr.mxu0 0.0
    %1659 = vmatpush1.msra.mxu0 0.0
    %1660 = vmatprep.subr.mxu0 0.0
    %1661 = vmatpush1.msra.mxu0 0.0
    %1662 = vmatprep.subr.mxu0 0.0
    %1663 = vmatpush1.msra.mxu0 0.0
    %1664 = vmatprep.subr.mxu0 0.0
    %1665 = vmatpush1.msra.mxu0 0.0
    %1666 = vmatprep.subr.mxu0 0.0
    %1667 = vmatpush1.msra.mxu0 0.0
    %1668 = vmatprep.subr.mxu0 0.0
    %1669 = vmatpush1.msra.mxu0 0.0
    %1670 = vmatprep.subr.mxu0 0.0
    %1671 = vmatpush1.msra.mxu0 0.0
    %1672 = vmatprep.subr.mxu0 0.0
    %1673 = vmatpush1.msra.mxu0 0.0
    %1674 = vmatprep.subr.mxu0 0.0
    %1675 = vmatpush1.msra.mxu0 0.0
    %1676 = vmatprep.subr.mxu0 0.0
    %1677 = vmatpush1.msra.mxu0 0.0
    %1678 = vmatprep.subr.mxu0 0.0
    %1679 = vmatpush1.msra.mxu0 0.0
    %1680 = vmatprep.mubr.f32.mxu0 0.0
    %1681 = vmatmul.mubr.f32.gmra.mrb[0].mxu0 %v1077
    %v1682 = vpop.f32.mrb[0].mxu0
    %v1683 = vadd.f32 %v878, %v1682
    %v1684 = vpop.f32.mrb[0].mxu0
    %v1685 = vadd.f32 %v882, %v1684
    %1686 = vmatprep.mubr.f32.mxu0 0.0
    %1687 = vmatmul.mubr.f32.gmra.mrb[0].mxu0 %v1078
    %v1688 = vpop.f32.mrb[0].mxu0
    %v1689 = vadd.f32 %v878, %v1688
    %v1690 = vpop.f32.mrb[0].mxu0
    %v1691 = vadd.f32 %v882, %v1690
    %1692 = vdwg.mxu0
    %1693 = vmatprep.subr.mxu0 0.0
    %1694 = vmatpush1.msra.mxu0 %v180
    %1695 = vmatprep.subr.mxu0 0.0
    %1696 = vmatpush1.msra.mxu0 %v183
    %1697 = vmatprep.subr.mxu0 0.0
    %1698 = vmatpush1.msra.mxu0 %v186
    %1699 = vmatprep.subr.mxu0 0.0
    %1700 = vmatpush1.msra.mxu0 %v189
    %1701 = vmatprep.subr.mxu0 0.0
    %1702 = vmatpush1.msra.mxu0 %v192
    %1703 = vmatprep.subr.mxu0 0.0
    %1704 = vmatpush1.msra.mxu0 %v195
    %1705 = vmatprep.subr.mxu0 0.0
    %1706 = vmatpush1.msra.mxu0 %v198
    %1707 = vmatprep.subr.mxu0 0.0
    %1708 = vmatpush1.msra.mxu0 %v201
    %1709 = vmatprep.subr.mxu0 0.0
    %1710 = vmatpush1.msra.mxu0 %v204
    %1711 = vmatprep.subr.mxu0 0.0
    %1712 = vmatpush1.msra.mxu0 %v207
    %1713 = vmatprep.subr.mxu0 0.0
    %1714 = vmatpush1.msra.mxu0 %v210
    %1715 = vmatprep.subr.mxu0 0.0
    %1716 = vmatpush1.msra.mxu0 %v213
    %1717 = vmatprep.subr.mxu0 0.0
    %1718 = vmatpush1.msra.mxu0 %v216
    %1719 = vmatprep.subr.mxu0 0.0
    %1720 = vmatpush1.msra.mxu0 %v219
    %1721 = vmatprep.subr.mxu0 0.0
    %1722 = vmatpush1.msra.mxu0 %v222
    %1723 = vmatprep.subr.mxu0 0.0
    %1724 = vmatpush1.msra.mxu0 %v225
    %1725 = vmatprep.subr.mxu0 0.0
    %1726 = vmatpush1.msra.mxu0 0.0
    %1727 = vmatprep.subr.mxu0 0.0
    %1728 = vmatpush1.msra.mxu0 0.0
    %1729 = vmatprep.subr.mxu0 0.0
    %1730 = vmatpush1.msra.mxu0 0.0
    %1731 = vmatprep.subr.mxu0 0.0
    %1732 = vmatpush1.msra.mxu0 0.0
    %1733 = vmatprep.subr.mxu0 0.0
    %1734 = vmatpush1.msra.mxu0 0.0
    %1735 = vmatprep.subr.mxu0 0.0
    %1736 = vmatpush1.msra.mxu0 0.0
    %1737 = vmatprep.subr.mxu0 0.0
    %1738 = vmatpush1.msra.mxu0 0.0
    %1739 = vmatprep.subr.mxu0 0.0
    %1740 = vmatpush1.msra.mxu0 0.0
    %1741 = vmatprep.subr.mxu0 0.0
    %1742 = vmatpush1.msra.mxu0 0.0
    %1743 = vmatprep.subr.mxu0 0.0
    %1744 = vmatpush1.msra.mxu0 0.0
    %1745 = vmatprep.subr.mxu0 0.0
    %1746 = vmatpush1.msra.mxu0 0.0
    %1747 = vmatprep.subr.mxu0 0.0
    %1748 = vmatpush1.msra.mxu0 0.0
    %1749 = vmatprep.subr.mxu0 0.0
    %1750 = vmatpush1.msra.mxu0 0.0
    %1751 = vmatprep.subr.mxu0 0.0
    %1752 = vmatpush1.msra.mxu0 0.0
    %1753 = vmatprep.subr.mxu0 0.0
    %1754 = vmatpush1.msra.mxu0 0.0
    %1755 = vmatprep.subr.mxu0 0.0
    %1756 = vmatpush1.msra.mxu0 0.0
    %1757 = vmatprep.mubr.f32.mxu0 0.0
    %1758 = vmatmul.mubr.f32.gmra.mrb[0].mxu0 %v1077
    %v1759 = vpop.f32.mrb[0].mxu0
    %v1760 = vadd.f32 %v886, %v1759
    %v1761 = vpop.f32.mrb[0].mxu0
    %1762 = vmatprep.mubr.f32.mxu0 0.0
    %1763 = vmatmul.mubr.f32.gmra.mrb[0].mxu0 %v1078
    %v1764 = vpop.f32.mrb[0].mxu0
    %v1765 = vadd.f32 %v886, %v1764
    %v1766 = vpop.f32.mrb[0].mxu0
    %1767 = vdwg.mxu0
    %v1768 = vadd.f32 %v1610, %v1683
    %v1769 = vadd.f32 %v1613, %v1689
    %v1770 = vxor.u32 %v1768, 2147483648
    %v1771 = vxor.u32 %v1769, 2147483648
    %v1772 = vmul.f32 %v1770, 1.442695
    %v1773 = vpow.pop %v1772
    %v1774 = vmul.f32 %v1771, 1.442695
    %v1775 = vpow.pop %v1774
    %v1776 = vadd.f32 %v1773, 1.0
    %v1777 = vadd.f32 %v1775, 1.0
    %v1778 = vrcp.pop %v1776
    %v1779 = vmul.f32 1.0, %v1778
    %v1780 = vrcp.pop %v1777
    %v1781 = vmul.f32 1.0, %v1780
    %v1782 = vadd.f32 %v1611, %v1685
    %v1783 = vadd.f32 %v1614, %v1691
    %v1784 = vxor.u32 %v1782, 2147483648
    %v1785 = vxor.u32 %v1783, 2147483648
    %v1786 = vmul.f32 %v1784, 1.442695
    %v1787 = vpow.pop %v1786
    %v1788 = vmul.f32 %v1785, 1.442695
    %v1789 = vpow.pop %v1788
    %v1790 = vadd.f32 %v1787, 1.0
    %v1791 = vadd.f32 %v1789, 1.0
    %v1792 = vrcp.pop %v1790
    %v1793 = vmul.f32 1.0, %v1792
    %v1794 = vrcp.pop %v1791
    %v1795 = vmul.f32 1.0, %v1794
    %v1796 = vmul.f32 %v1779, %v1760
    %v1797 = vmul.f32 %v1781, %v1765
    %v1798 = vadd.f32 %v1612, %v1796
    %v1799 = vadd.f32 %v1615, %v1797
    %v1800 = vtanh.pop %v1798
    %v1801 = vtanh.pop %v1799
    %v1802 = vsub.f32 %v1077, %v1800
    %v1803 = vsub.f32 %v1078, %v1801
    %v1804 = vmul.f32 %v1793, %v1802
    %v1805 = vmul.f32 %v1795, %v1803
    %v1806 = vadd.f32 %v1800, %v1804
    %v1807 = vadd.f32 %v1801, %v1805
    %1808 = vst [vmem:[#allocation10] sm:$0xff] %v1806
    %1809 = vst [vmem:[#allocation10 + $0x8] sm:$0xff] %v1807
    // Predicated region
    $region38: #{tpu_custom_call.1} parent=1 // pred_check
      _
    $region39: #{tpu_custom_call.1} parent=1 // pred_check_branch
      %1811 = sbr.rel (0) target = $region41
    $region40: #{tpu_custom_call.1} parent=1 // pred_region
      %s1813 = ssub.s32 256, 256
      %1814 = vsyncadd [#allocation4], %s1813
      %s1815 = sshll.u32 [#allocation10], 4
      %s1816 = int_to_ptr.vmem [resolvable:$true] %s1815
      %1821 = dma.vmem_to_hbm [thread:$0]  %s1816, 256, %s5, [#allocation4], 128, 128, 8
    $region41: #{tpu_custom_call.1} parent=1 // pred_fallthru
      _
    // Predicated region
    $region42: #{tpu_custom_call.1} parent=1 // pred_check
      _
    $region43: #{tpu_custom_call.1} parent=1 // pred_check_branch
      %1823 = sbr.rel (0) target = $region45
    $region44: #{tpu_custom_call.1} parent=1 // pred_region
      %1824 = dma.done [#allocation4], 256
    $region45: #{tpu_custom_call.1} parent=1 // pred_fallthru
      _
    %1825 = vsyncpa [#allocation3], 1
    %1826 = vsyncpa [#allocation6], 1
    %1827 = vsyncpa [#allocation9], 1
    %1828 = vsyncpa [#allocation4], 1

</llo_original>
